<compile_context>
chip_gen: v7x
topology: tpu7x:2x2x1
jax: 0.10.0
libtpu: 0.0.40
codegen_flags: <defaults>
</compile_context>

<pallas_src>
import functools
import math

import jax
import jax.numpy as jnp
from jax import lax
from jax.experimental import pallas as pl
from jax.experimental.pallas import tpu as pltpu

# Deliberate scoped-VMEM budget: above the v5e (16 MiB) / v6e,v7x (32 MiB) defaults but
# comfortably under v7x's 64 MiB physical VMEM.
VMEM_LIMIT_BYTES = 48 * 1024 * 1024


# ----------------------------- in-kernel helpers -----------------------------

def _layernorm(h, gamma, beta, eps=1e-5):
    mu = jnp.mean(h, axis=-1, keepdims=True)
    var = jnp.mean((h - mu) ** 2, axis=-1, keepdims=True)
    return (h - mu) * lax.rsqrt(var + eps) * gamma + beta


def _dot_bf16(a, b, contract):
    """MXU matmul with bf16 operands and f32 accumulation.

    contract = ((lhs_dims,), (rhs_dims,)) contracting dimension numbers.
    """
    return lax.dot_general(
        a.astype(jnp.bfloat16), b.astype(jnp.bfloat16),
        dimension_numbers=(contract, ((), ())),
        preferred_element_type=jnp.float32)


# ------------------------------ attention kernel -----------------------------

def attn_block_kernel(x_ref, vecs_ref, wqkv_ref, wproj_ref, o_ref,
                      *, num_heads, scale, q_tile):
    vecs = vecs_ref[...].astype(jnp.float32)     # (4, C): [ln_g, ln_b, proj_bias, gamma_1]
    ln_g, ln_b, bproj, gamma1 = vecs[0], vecs[1], vecs[2], vecs[3]

    # Full sequence (drives K/V); the query-row tile is sliced from the same ref.
    x_full = x_ref[0].astype(jnp.float32)        # (N, C)
    C = x_full.shape[-1]
    hd = C // num_heads

    row0 = pl.multiple_of(pl.program_id(1) * q_tile, q_tile)
    xq = x_ref[0, pl.ds(row0, q_tile), :].astype(jnp.float32)    # (Tq, C) residual rows

    hq = _layernorm(xq, ln_g, ln_b).astype(jnp.bfloat16)
    hkv = _layernorm(x_full, ln_g, ln_b).astype(jnp.bfloat16)

    wqkv = wqkv_ref[...]     # (C, 3C) bf16
    wproj = wproj_ref[...]   # (C, C)  bf16

    # Split the qkv projection at C-aligned lane boundaries first (q | k | v),
    # then slice per head inside each C-wide block.
    q = (_dot_bf16(hq, wqkv[:, :C], ((1,), (0,))) * scale).astype(jnp.bfloat16)   # (Tq, C)
    k = _dot_bf16(hkv, wqkv[:, C:2 * C], ((1,), (0,))).astype(jnp.bfloat16)       # (N, C)
    v = _dot_bf16(hkv, wqkv[:, 2 * C:], ((1,), (0,))).astype(jnp.bfloat16)        # (N, C)

    out = jnp.zeros_like(xq)                      # f32 (Tq, C) projection accumulator
    for hi in range(num_heads):
        sl = slice(hi * hd, (hi + 1) * hd)
        # QK^T: contract the head dim of q with the head dim of k (no explicit .T).
        s = _dot_bf16(q[:, sl], k[:, sl], ((1,), (1,)))                 # (Tq, N) f32
        s = s - jnp.max(s, axis=-1, keepdims=True)
        p = jnp.exp(s)
        p = p * pl.reciprocal(jnp.sum(p, axis=-1, keepdims=True), approx=True)
        ctx = _dot_bf16(p, v[:, sl], ((1,), (0,)))                      # (Tq, hd) f32
        # Accumulate this head's contribution straight through its row-slice of the
        # projection weight: no ctx concatenate, no per-head lane-slice stores.
        out = out + _dot_bf16(ctx, wproj[sl, :], ((1,), (0,)))          # (Tq, C) f32

    out = out + bproj
    o_ref[0] = (xq + gamma1 * out).astype(o_ref.dtype)


def _largest_divisor_at_most(n, cap):
    for d in range(min(n, cap), 0, -1):
        if n % d == 0:
            return d
    return 1


def attn_block(x, ln_g, ln_b, wqkv, wproj, bproj, gamma1, *, num_heads, scale,
               q_tile=None):
    B, N, C = x.shape
    if q_tile is None:
        # Whole sequence per step for short sequences; row-tile longer ones.
        q_tile = N if N <= 512 else _largest_divisor_at_most(N, 256)
    assert N % q_tile == 0

    # Pack the per-channel vectors into one (4, C) operand (one DMA instead of four).
    vecs = jnp.stack([ln_g, ln_b, bproj, gamma1]).astype(jnp.float32)
    wqkv_bf = wqkv.astype(jnp.bfloat16)
    wproj_bf = wproj.astype(jnp.bfloat16)

    kernel = functools.partial(attn_block_kernel, num_heads=num_heads, scale=scale,
                               q_tile=q_tile)
    return pl.pallas_call(
        kernel,
        out_shape=jax.ShapeDtypeStruct((B, N, C), x.dtype),
        grid=(B, N // q_tile),
        in_specs=[
            pl.BlockSpec((1, N, C), lambda b, t: (b, 0, 0)),        # full sequence
            pl.BlockSpec((4, C), lambda b, t: (0, 0)),              # packed vectors
            pl.BlockSpec((C, 3 * C), lambda b, t: (0, 0)),          # qkv weight (bf16)
            pl.BlockSpec((C, C), lambda b, t: (0, 0)),              # proj weight (bf16)
        ],
        out_specs=pl.BlockSpec((1, q_tile, C), lambda b, t: (b, t, 0)),
        compiler_params=pltpu.CompilerParams(
            dimension_semantics=("parallel", "parallel"),
            vmem_limit_bytes=VMEM_LIMIT_BYTES),
    )(x, vecs, wqkv_bf, wproj_bf)


# ------------------------- fused MoME (text/image) MLP ------------------------

def mome_mlp_kernel(expert_ids_ref, x_ref, vecs_ref, w1_ref, b1_ref, w2_ref, o_ref):
    del expert_ids_ref  # only used by the index_maps (weight selection)
    x = x_ref[0].astype(jnp.float32)             # (Tn, C) token tile
    vecs = vecs_ref[0].astype(jnp.float32)       # (4, C): [ln_g, ln_b, fc2_bias, gamma_2]
    ln_g, ln_b, b2, gamma2 = vecs[0], vecs[1], vecs[2], vecs[3]

    h = _layernorm(x, ln_g, ln_b)
    h = _dot_bf16(h, w1_ref[0], ((1,), (0,))) + b1_ref[0, 0].astype(jnp.float32)
    # nn.GELU default = exact erf GELU.
    # (On v6e, approximate=True would move the transcendental onto the EUP slot.)
    h = jax.nn.gelu(h, approximate=False)
    out = _dot_bf16(h, w2_ref[0], ((1,), (0,))) + b2
    o_ref[0] = (x + gamma2 * out).astype(o_ref.dtype)


def mome_mlp_block(x, text_p, imag_p, gamma2, *, max_text_len, token_tile=None):
    B, N, C = x.shape
    H = text_p["w1"].shape[1]

    if token_tile is None:
        # Tile must divide both segment boundaries so each tile is single-expert.
        token_tile = _largest_divisor_at_most(math.gcd(max_text_len, N) or N, 512)
    num_tiles = N // token_tile
    expert_ids = jnp.array(
        [0 if t * token_tile < max_text_len else 1 for t in range(num_tiles)],
        dtype=jnp.int32)

    # Stacked (expert-indexed) parameters: expert 0 = text, expert 1 = image.
    vecs = jnp.stack([
        jnp.stack([text_p["ln_g"], text_p["ln_b"], text_p["b2"], gamma2]),
        jnp.stack([imag_p["ln_g"], imag_p["ln_b"], imag_p["b2"], gamma2]),
    ]).astype(jnp.float32)                                                # (2, 4, C)
    w1s = jnp.stack([text_p["w1"], imag_p["w1"]]).astype(jnp.bfloat16)    # (2, C, H)
    b1s = jnp.stack([text_p["b1"], imag_p["b1"]]).astype(jnp.float32).reshape(2, 1, H)
    w2s = jnp.stack([text_p["w2"], imag_p["w2"]]).astype(jnp.bfloat16)    # (2, H, C)

    grid_spec = pltpu.PrefetchScalarGridSpec(
        num_scalar_prefetch=1,
        grid=(B, num_tiles),
        in_specs=[
            pl.BlockSpec((1, token_tile, C), lambda b, t, eid: (b, t, 0)),
            pl.BlockSpec((1, 4, C), lambda b, t, eid: (eid[t], 0, 0)),
            pl.BlockSpec((1, C, H), lambda b, t, eid: (eid[t], 0, 0)),
            pl.BlockSpec((1, 1, H), lambda b, t, eid: (eid[t], 0, 0)),
            pl.BlockSpec((1, H, C), lambda b, t, eid: (eid[t], 0, 0)),
        ],
        out_specs=pl.BlockSpec((1, token_tile, C), lambda b, t, eid: (b, t, 0)),
    )
    return pl.pallas_call(
        mome_mlp_kernel,
        out_shape=jax.ShapeDtypeStruct((B, N, C), x.dtype),
        grid_spec=grid_spec,
        compiler_params=pltpu.CompilerParams(
            dimension_semantics=("parallel", "parallel"),
            vmem_limit_bytes=VMEM_LIMIT_BYTES),
    )(expert_ids, x, vecs, w1s, b1s, w2s)


# ------------------------------ MoMEBlock wrapper -----------------------------

def mome_block(x, p, *, num_heads, max_text_len):
    C = x.shape[-1]
    scale = (C // num_heads) ** (-0.5)
    # x = x + gamma_1 * attn(norm1(x))
    x = attn_block(x, p["ln1_g"], p["ln1_b"], p["wqkv"], p["wproj"], p["bproj"],
                   p["gamma1"], num_heads=num_heads, scale=scale)
    # Default MoME routing (modality_type=None, mlp_vl=None):
    # text tokens [:max_text_len] -> mlp_text, image tokens [max_text_len:] -> mlp_imag,
    # fused into a single pallas_call (expert selected per token tile via scalar prefetch).
    text_p = dict(ln_g=p["lnt_g"], ln_b=p["lnt_b"],
                  w1=p["wt1"], b1=p["bt1"], w2=p["wt2"], b2=p["bt2"])
    imag_p = dict(ln_g=p["lni_g"], ln_b=p["lni_b"],
                  w1=p["wi1"], b1=p["bi1"], w2=p["wi2"], b2=p["bi2"])
    return mome_mlp_block(x, text_p, imag_p, p["gamma2"], max_text_len=max_text_len)


# --------------------------- pure-JAX reference check -------------------------

def mome_block_reference(x, p, *, num_heads, max_text_len):
    def ln(h, g, b):
        mu = jnp.mean(h, -1, keepdims=True)
        var = jnp.mean((h - mu) ** 2, -1, keepdims=True)
        return (h - mu) * lax.rsqrt(var + 1e-5) * g + b

    B, N, C = x.shape
    hd = C // num_heads
    scale = hd ** (-0.5)

    h = ln(x, p["ln1_g"], p["ln1_b"])
    qkv = h @ p["wqkv"]
    qkv = qkv.reshape(B, N, 3, num_heads, hd).transpose(2, 0, 3, 1, 4)
    q, k, v = qkv[0] * scale, qkv[1], qkv[2]
    attn = jnp.einsum("bhnd,bhmd->bhnm", q, k)
    attn = jax.nn.softmax(attn, axis=-1)
    ctx = jnp.einsum("bhnm,bhmd->bhnd", attn, v).transpose(0, 2, 1, 3).reshape(B, N, C)
    x = x + p["gamma1"] * (ctx @ p["wproj"] + p["bproj"])

    def branch(seg, g, b, w1, b1, w2, b2):
        hseg = ln(seg, g, b)
        hseg = jax.nn.gelu(hseg @ w1 + b1, approximate=False)
        return seg + p["gamma2"] * (hseg @ w2 + b2)

    x_text = branch(x[:, :max_text_len], p["lnt_g"], p["lnt_b"],
                    p["wt1"], p["bt1"], p["wt2"], p["bt2"])
    x_imag = branch(x[:, max_text_len:], p["lni_g"], p["lni_b"],
                    p["wi1"], p["bi1"], p["wi2"], p["bi2"])
    return jnp.concatenate([x_text, x_imag], axis=1)


# ------------------------------------ main ------------------------------------

if __name__ == "__main__":
    B, N, C = 2, 16, 32
    num_heads = 4
    mlp_ratio = 4.0
    H = int(C * mlp_ratio)
    max_text_len = 8
    layer_scale_init = 0.1

    key = jax.random.PRNGKey(0)
    ks = jax.random.split(key, 20)

    def w(k, shape, s=0.02):
        return (s * jax.random.normal(k, shape)).astype(jnp.float32)

    params = {
        # norm1 + attention (qkv_bias=False -> no qkv bias)
        "ln1_g": 1.0 + w(ks[0], (C,), 0.1), "ln1_b": w(ks[1], (C,), 0.1),
        "wqkv": w(ks[2], (C, 3 * C)),                 # stored as (in, out): h @ wqkv
        "wproj": w(ks[3], (C, C)), "bproj": w(ks[4], (C,), 0.1),
        # norm2_text + mlp_text
        "lnt_g": 1.0 + w(ks[5], (C,), 0.1), "lnt_b": w(ks[6], (C,), 0.1),
        "wt1": w(ks[7], (C, H)), "bt1": w(ks[8], (H,), 0.1),
        "wt2": w(ks[9], (H, C)), "bt2": w(ks[10], (C,), 0.1),
        # norm2_imag + mlp_imag
        "lni_g": 1.0 + w(ks[11], (C,), 0.1), "lni_b": w(ks[12], (C,), 0.1),
        "wi1": w(ks[13], (C, H)), "bi1": w(ks[14], (H,), 0.1),
        "wi2": w(ks[15], (H, C)), "bi2": w(ks[16], (C,), 0.1),
        # layer scales
        "gamma1": jnp.full((C,), layer_scale_init, jnp.float32),
        "gamma2": jnp.full((C,), layer_scale_init, jnp.float32),
    }

    x = jax.random.normal(ks[17], (B, N, C), dtype=jnp.float32)

    out = mome_block(x, params, num_heads=num_heads, max_text_len=max_text_len)
    out = jax.block_until_ready(out)

    ref = mome_block_reference(x, params, num_heads=num_heads, max_text_len=max_text_len)
    assert out.shape == (B, N, C)
    # bf16 MXU operands -> slightly looser tolerance than a pure-f32 comparison.
    max_diff = float(jnp.max(jnp.abs(out - ref)))
    assert jnp.allclose(out, ref, atol=2e-2, rtol=2e-2), f"max abs diff {max_diff}"

    print("KERNEL_OK")
</pallas_src>

<mosaic_0001>
module attributes {stable_mosaic.version = 11 : i64} {
  func.func @attn_block_kernel(%arg0: i32, %arg1: i32, %arg2: memref<1x16x32xf32, #tpu.memory_space<vmem>>, %arg3: memref<4x32xf32, #tpu.memory_space<vmem>>, %arg4: memref<32x96xbf16, #tpu.memory_space<vmem>>, %arg5: memref<32x32xbf16, #tpu.memory_space<vmem>>, %arg6: memref<1x16x32xf32, #tpu.memory_space<vmem>>) attributes {dimension_semantics = [#tpu.dimension_semantics<parallel>, #tpu.dimension_semantics<parallel>], iteration_bounds = array<i64: 2, 1>, scalar_prefetch = 0 : i64, scratch_operands = 0 : i64, tpu.core_type = #tpu.core_type<tc>, window_params = [{transform_indices = @transform_0, window_bounds = array<i64: 1, 16, 32>}, {pipeline_mode = #tpu.pipeline_mode<synchronous>, transform_indices = @transform_1, window_bounds = array<i64: 4, 32>}, {pipeline_mode = #tpu.pipeline_mode<synchronous>, transform_indices = @transform_2, window_bounds = array<i64: 32, 96>}, {pipeline_mode = #tpu.pipeline_mode<synchronous>, transform_indices = @transform_3, window_bounds = array<i64: 32, 32>}, {transform_indices = @transform_4, window_bounds = array<i64: 1, 16, 32>}]} {
    %c0 = arith.constant 0 : index
    %c0_0 = arith.constant 0 : index
    %0 = vector.load %arg3[%c0, %c0_0] : memref<4x32xf32, #tpu.memory_space<vmem>>, vector<4x32xf32>
    %1 = vector.extract_strided_slice %0 {offsets = [0, 0], sizes = [1, 32], strides = [1, 1]} : vector<4x32xf32> to vector<1x32xf32>
    %2 = vector.shape_cast %1 : vector<1x32xf32> to vector<32xf32>
    %3 = vector.extract_strided_slice %0 {offsets = [1, 0], sizes = [1, 32], strides = [1, 1]} : vector<4x32xf32> to vector<1x32xf32>
    %4 = vector.shape_cast %3 : vector<1x32xf32> to vector<32xf32>
    %5 = vector.extract_strided_slice %0 {offsets = [2, 0], sizes = [1, 32], strides = [1, 1]} : vector<4x32xf32> to vector<1x32xf32>
    %6 = vector.shape_cast %5 : vector<1x32xf32> to vector<32xf32>
    %7 = vector.extract_strided_slice %0 {offsets = [3, 0], sizes = [1, 32], strides = [1, 1]} : vector<4x32xf32> to vector<1x32xf32>
    %8 = vector.shape_cast %7 : vector<1x32xf32> to vector<32xf32>
    %c0_1 = arith.constant 0 : index
    %c0_2 = arith.constant 0 : index
    %c0_3 = arith.constant 0 : index
    %9 = vector.load %arg2[%c0_1, %c0_2, %c0_3] : memref<1x16x32xf32, #tpu.memory_space<vmem>>, vector<1x16x32xf32>
    %10 = vector.shape_cast %9 : vector<1x16x32xf32> to vector<16x32xf32>
    %c16_i32 = arith.constant 16 : i32
    %11 = arith.muli %arg1, %c16_i32 : i32
    %12 = tpu.assume_multiple %11, 16 : i32
    %c0_4 = arith.constant 0 : index
    %13 = arith.index_cast %12 : i32 to index
    %c0_5 = arith.constant 0 : index
    %14 = vector.load %arg2[%c0_4, %13, %c0_5] : memref<1x16x32xf32, #tpu.memory_space<vmem>>, vector<1x16x32xf32>
    %15 = vector.shape_cast %14 : vector<1x16x32xf32> to vector<16x32xf32>
    %cst = arith.constant dense<0.000000e+00> : vector<16xf32>
    %16 = vector.multi_reduction <add>, %15, %cst [1] : vector<16x32xf32> to vector<16xf32>
    %17 = vector.shape_cast %16 : vector<16xf32> to vector<16x1xf32>
    %cst_6 = arith.constant 3.200000e+01 : f32
    %18 = vector.broadcast %cst_6 : f32 to vector<16x1xf32>
    %19 = arith.divf %17, %18 : vector<16x1xf32>
    %20 = vector.broadcast %19 : vector<16x1xf32> to vector<16x32xf32>
    %21 = arith.subf %15, %20 : vector<16x32xf32>
    %22 = arith.mulf %21, %21 : vector<16x32xf32>
    %cst_7 = arith.constant dense<0.000000e+00> : vector<16xf32>
    %23 = vector.multi_reduction <add>, %22, %cst_7 [1] : vector<16x32xf32> to vector<16xf32>
    %24 = vector.shape_cast %23 : vector<16xf32> to vector<16x1xf32>
    %cst_8 = arith.constant 3.200000e+01 : f32
    %25 = vector.broadcast %cst_8 : f32 to vector<16x1xf32>
    %26 = arith.divf %24, %25 : vector<16x1xf32>
    %27 = vector.broadcast %19 : vector<16x1xf32> to vector<16x32xf32>
    %28 = arith.subf %15, %27 : vector<16x32xf32>
    %cst_9 = arith.constant 9.99999974E-6 : f32
    %29 = vector.broadcast %cst_9 : f32 to vector<16x1xf32>
    %30 = arith.addf %26, %29 : vector<16x1xf32>
    %31 = math.rsqrt %30 : vector<16x1xf32>
    %32 = vector.broadcast %31 : vector<16x1xf32> to vector<16x32xf32>
    %33 = arith.mulf %28, %32 : vector<16x32xf32>
    %34 = vector.shape_cast %2 : vector<32xf32> to vector<1x32xf32>
    %35 = vector.broadcast %34 : vector<1x32xf32> to vector<16x32xf32>
    %36 = arith.mulf %33, %35 : vector<16x32xf32>
    %37 = vector.shape_cast %4 : vector<32xf32> to vector<1x32xf32>
    %38 = vector.broadcast %37 : vector<1x32xf32> to vector<16x32xf32>
    %39 = arith.addf %36, %38 : vector<16x32xf32>
    %40 = arith.truncf %39 : vector<16x32xf32> to vector<16x32xbf16>
    %cst_10 = arith.constant dense<0.000000e+00> : vector<16xf32>
    %41 = vector.multi_reduction <add>, %10, %cst_10 [1] : vector<16x32xf32> to vector<16xf32>
    %42 = vector.shape_cast %41 : vector<16xf32> to vector<16x1xf32>
    %cst_11 = arith.constant 3.200000e+01 : f32
    %43 = vector.broadcast %cst_11 : f32 to vector<16x1xf32>
    %44 = arith.divf %42, %43 : vector<16x1xf32>
    %45 = vector.broadcast %44 : vector<16x1xf32> to vector<16x32xf32>
    %46 = arith.subf %10, %45 : vector<16x32xf32>
    %47 = arith.mulf %46, %46 : vector<16x32xf32>
    %cst_12 = arith.constant dense<0.000000e+00> : vector<16xf32>
    %48 = vector.multi_reduction <add>, %47, %cst_12 [1] : vector<16x32xf32> to vector<16xf32>
    %49 = vector.shape_cast %48 : vector<16xf32> to vector<16x1xf32>
    %cst_13 = arith.constant 3.200000e+01 : f32
    %50 = vector.broadcast %cst_13 : f32 to vector<16x1xf32>
    %51 = arith.divf %49, %50 : vector<16x1xf32>
    %52 = vector.broadcast %44 : vector<16x1xf32> to vector<16x32xf32>
    %53 = arith.subf %10, %52 : vector<16x32xf32>
    %cst_14 = arith.constant 9.99999974E-6 : f32
    %54 = vector.broadcast %cst_14 : f32 to vector<16x1xf32>
    %55 = arith.addf %51, %54 : vector<16x1xf32>
    %56 = math.rsqrt %55 : vector<16x1xf32>
    %57 = vector.broadcast %56 : vector<16x1xf32> to vector<16x32xf32>
    %58 = arith.mulf %53, %57 : vector<16x32xf32>
    %59 = vector.shape_cast %2 : vector<32xf32> to vector<1x32xf32>
    %60 = vector.broadcast %59 : vector<1x32xf32> to vector<16x32xf32>
    %61 = arith.mulf %58, %60 : vector<16x32xf32>
    %62 = vector.shape_cast %4 : vector<32xf32> to vector<1x32xf32>
    %63 = vector.broadcast %62 : vector<1x32xf32> to vector<16x32xf32>
    %64 = arith.addf %61, %63 : vector<16x32xf32>
    %65 = arith.truncf %64 : vector<16x32xf32> to vector<16x32xbf16>
    %c0_15 = arith.constant 0 : index
    %c0_16 = arith.constant 0 : index
    %66 = vector.load %arg4[%c0_15, %c0_16] : memref<32x96xbf16, #tpu.memory_space<vmem>>, vector<32x96xbf16>
    %c0_17 = arith.constant 0 : index
    %c0_18 = arith.constant 0 : index
    %67 = vector.load %arg5[%c0_17, %c0_18] : memref<32x32xbf16, #tpu.memory_space<vmem>>, vector<32x32xbf16>
    %68 = vector.extract_strided_slice %66 {offsets = [0, 0], sizes = [32, 32], strides = [1, 1]} : vector<32x96xbf16> to vector<32x32xbf16>
    %cst_19 = arith.constant dense<0.000000e+00> : vector<16x32xf32>
    %69 = tpu.matmul %40, %68, %cst_19 {dimension_numbers = #tpu.dot_dimension_numbers<[1], [0], [0], [1], [0, 0, 1, 1], [], []>} : vector<16x32xbf16>, vector<32x32xbf16>, vector<16x32xf32> -> vector<16x32xf32>
    %cst_20 = arith.constant 0.353553385 : f32
    %70 = vector.broadcast %cst_20 : f32 to vector<16x32xf32>
    %71 = arith.mulf %69, %70 : vector<16x32xf32>
    %72 = arith.truncf %71 : vector<16x32xf32> to vector<16x32xbf16>
    %73 = vector.extract_strided_slice %66 {offsets = [0, 32], sizes = [32, 32], strides = [1, 1]} : vector<32x96xbf16> to vector<32x32xbf16>
    %cst_21 = arith.constant dense<0.000000e+00> : vector<16x32xf32>
    %74 = tpu.matmul %65, %73, %cst_21 {dimension_numbers = #tpu.dot_dimension_numbers<[1], [0], [0], [1], [0, 0, 1, 1], [], []>} : vector<16x32xbf16>, vector<32x32xbf16>, vector<16x32xf32> -> vector<16x32xf32>
    %75 = arith.truncf %74 : vector<16x32xf32> to vector<16x32xbf16>
    %76 = vector.extract_strided_slice %66 {offsets = [0, 64], sizes = [32, 32], strides = [1, 1]} : vector<32x96xbf16> to vector<32x32xbf16>
    %cst_22 = arith.constant dense<0.000000e+00> : vector<16x32xf32>
    %77 = tpu.matmul %65, %76, %cst_22 {dimension_numbers = #tpu.dot_dimension_numbers<[1], [0], [0], [1], [0, 0, 1, 1], [], []>} : vector<16x32xbf16>, vector<32x32xbf16>, vector<16x32xf32> -> vector<16x32xf32>
    %78 = arith.truncf %77 : vector<16x32xf32> to vector<16x32xbf16>
    %cst_23 = arith.constant 0.000000e+00 : f32
    %79 = vector.broadcast %cst_23 : f32 to vector<16x32xf32>
    %80 = vector.extract_strided_slice %72 {offsets = [0, 0], sizes = [16, 8], strides = [1, 1]} : vector<16x32xbf16> to vector<16x8xbf16>
    %81 = vector.extract_strided_slice %75 {offsets = [0, 0], sizes = [16, 8], strides = [1, 1]} : vector<16x32xbf16> to vector<16x8xbf16>
    %cst_24 = arith.constant dense<0.000000e+00> : vector<16x16xf32>
    %82 = tpu.matmul %80, %81, %cst_24 {dimension_numbers = #tpu.dot_dimension_numbers<[1], [1], [0], [0], [0, 0, 1, 0], [], []>} : vector<16x8xbf16>, vector<16x8xbf16>, vector<16x16xf32> -> vector<16x16xf32>
    %cst_25 = arith.constant dense<0xFF800000> : vector<16xf32>
    %83 = vector.multi_reduction <maximumf>, %82, %cst_25 [1] : vector<16x16xf32> to vector<16xf32>
    %84 = vector.shape_cast %83 : vector<16xf32> to vector<16x1xf32>
    %85 = vector.broadcast %84 : vector<16x1xf32> to vector<16x16xf32>
    %86 = arith.subf %82, %85 : vector<16x16xf32>
    %87 = math.exp %86 : vector<16x16xf32>
    %cst_26 = arith.constant dense<0.000000e+00> : vector<16xf32>
    %88 = vector.multi_reduction <add>, %87, %cst_26 [1] : vector<16x16xf32> to vector<16xf32>
    %89 = vector.shape_cast %88 : vector<16xf32> to vector<16x1xf32>
    %90 = tpu.reciprocal %89 {approx = true} : vector<16x1xf32> -> vector<16x1xf32>
    %91 = vector.broadcast %90 : vector<16x1xf32> to vector<16x16xf32>
    %92 = arith.mulf %87, %91 : vector<16x16xf32>
    %93 = vector.extract_strided_slice %78 {offsets = [0, 0], sizes = [16, 8], strides = [1, 1]} : vector<16x32xbf16> to vector<16x8xbf16>
    %94 = arith.truncf %92 : vector<16x16xf32> to vector<16x16xbf16>
    %cst_27 = arith.constant dense<0.000000e+00> : vector<16x8xf32>
    %95 = tpu.matmul %94, %93, %cst_27 {dimension_numbers = #tpu.dot_dimension_numbers<[1], [0], [0], [1], [0, 0, 1, 1], [], []>} : vector<16x16xbf16>, vector<16x8xbf16>, vector<16x8xf32> -> vector<16x8xf32>
    %96 = vector.extract_strided_slice %67 {offsets = [0, 0], sizes = [8, 32], strides = [1, 1]} : vector<32x32xbf16> to vector<8x32xbf16>
    %97 = arith.truncf %95 : vector<16x8xf32> to vector<16x8xbf16>
    %cst_28 = arith.constant dense<0.000000e+00> : vector<16x32xf32>
    %98 = tpu.matmul %97, %96, %cst_28 {dimension_numbers = #tpu.dot_dimension_numbers<[1], [0], [0], [1], [0, 0, 1, 1], [], []>} : vector<16x8xbf16>, vector<8x32xbf16>, vector<16x32xf32> -> vector<16x32xf32>
    %99 = arith.addf %79, %98 : vector<16x32xf32>
    %100 = vector.extract_strided_slice %72 {offsets = [0, 8], sizes = [16, 8], strides = [1, 1]} : vector<16x32xbf16> to vector<16x8xbf16>
    %101 = vector.extract_strided_slice %75 {offsets = [0, 8], sizes = [16, 8], strides = [1, 1]} : vector<16x32xbf16> to vector<16x8xbf16>
    %cst_29 = arith.constant dense<0.000000e+00> : vector<16x16xf32>
    %102 = tpu.matmul %100, %101, %cst_29 {dimension_numbers = #tpu.dot_dimension_numbers<[1], [1], [0], [0], [0, 0, 1, 0], [], []>} : vector<16x8xbf16>, vector<16x8xbf16>, vector<16x16xf32> -> vector<16x16xf32>
    %cst_30 = arith.constant dense<0xFF800000> : vector<16xf32>
    %103 = vector.multi_reduction <maximumf>, %102, %cst_30 [1] : vector<16x16xf32> to vector<16xf32>
    %104 = vector.shape_cast %103 : vector<16xf32> to vector<16x1xf32>
    %105 = vector.broadcast %104 : vector<16x1xf32> to vector<16x16xf32>
    %106 = arith.subf %102, %105 : vector<16x16xf32>
    %107 = math.exp %106 : vector<16x16xf32>
    %cst_31 = arith.constant dense<0.000000e+00> : vector<16xf32>
    %108 = vector.multi_reduction <add>, %107, %cst_31 [1] : vector<16x16xf32> to vector<16xf32>
    %109 = vector.shape_cast %108 : vector<16xf32> to vector<16x1xf32>
    %110 = tpu.reciprocal %109 {approx = true} : vector<16x1xf32> -> vector<16x1xf32>
    %111 = vector.broadcast %110 : vector<16x1xf32> to vector<16x16xf32>
    %112 = arith.mulf %107, %111 : vector<16x16xf32>
    %113 = vector.extract_strided_slice %78 {offsets = [0, 8], sizes = [16, 8], strides = [1, 1]} : vector<16x32xbf16> to vector<16x8xbf16>
    %114 = arith.truncf %112 : vector<16x16xf32> to vector<16x16xbf16>
    %cst_32 = arith.constant dense<0.000000e+00> : vector<16x8xf32>
    %115 = tpu.matmul %114, %113, %cst_32 {dimension_numbers = #tpu.dot_dimension_numbers<[1], [0], [0], [1], [0, 0, 1, 1], [], []>} : vector<16x16xbf16>, vector<16x8xbf16>, vector<16x8xf32> -> vector<16x8xf32>
    %116 = vector.extract_strided_slice %67 {offsets = [8, 0], sizes = [8, 32], strides = [1, 1]} : vector<32x32xbf16> to vector<8x32xbf16>
    %117 = arith.truncf %115 : vector<16x8xf32> to vector<16x8xbf16>
    %cst_33 = arith.constant dense<0.000000e+00> : vector<16x32xf32>
    %118 = tpu.matmul %117, %116, %cst_33 {dimension_numbers = #tpu.dot_dimension_numbers<[1], [0], [0], [1], [0, 0, 1, 1], [], []>} : vector<16x8xbf16>, vector<8x32xbf16>, vector<16x32xf32> -> vector<16x32xf32>
    %119 = arith.addf %99, %118 : vector<16x32xf32>
    %120 = vector.extract_strided_slice %72 {offsets = [0, 16], sizes = [16, 8], strides = [1, 1]} : vector<16x32xbf16> to vector<16x8xbf16>
    %121 = vector.extract_strided_slice %75 {offsets = [0, 16], sizes = [16, 8], strides = [1, 1]} : vector<16x32xbf16> to vector<16x8xbf16>
    %cst_34 = arith.constant dense<0.000000e+00> : vector<16x16xf32>
    %122 = tpu.matmul %120, %121, %cst_34 {dimension_numbers = #tpu.dot_dimension_numbers<[1], [1], [0], [0], [0, 0, 1, 0], [], []>} : vector<16x8xbf16>, vector<16x8xbf16>, vector<16x16xf32> -> vector<16x16xf32>
    %cst_35 = arith.constant dense<0xFF800000> : vector<16xf32>
    %123 = vector.multi_reduction <maximumf>, %122, %cst_35 [1] : vector<16x16xf32> to vector<16xf32>
    %124 = vector.shape_cast %123 : vector<16xf32> to vector<16x1xf32>
    %125 = vector.broadcast %124 : vector<16x1xf32> to vector<16x16xf32>
    %126 = arith.subf %122, %125 : vector<16x16xf32>
    %127 = math.exp %126 : vector<16x16xf32>
    %cst_36 = arith.constant dense<0.000000e+00> : vector<16xf32>
    %128 = vector.multi_reduction <add>, %127, %cst_36 [1] : vector<16x16xf32> to vector<16xf32>
    %129 = vector.shape_cast %128 : vector<16xf32> to vector<16x1xf32>
    %130 = tpu.reciprocal %129 {approx = true} : vector<16x1xf32> -> vector<16x1xf32>
    %131 = vector.broadcast %130 : vector<16x1xf32> to vector<16x16xf32>
    %132 = arith.mulf %127, %131 : vector<16x16xf32>
    %133 = vector.extract_strided_slice %78 {offsets = [0, 16], sizes = [16, 8], strides = [1, 1]} : vector<16x32xbf16> to vector<16x8xbf16>
    %134 = arith.truncf %132 : vector<16x16xf32> to vector<16x16xbf16>
    %cst_37 = arith.constant dense<0.000000e+00> : vector<16x8xf32>
    %135 = tpu.matmul %134, %133, %cst_37 {dimension_numbers = #tpu.dot_dimension_numbers<[1], [0], [0], [1], [0, 0, 1, 1], [], []>} : vector<16x16xbf16>, vector<16x8xbf16>, vector<16x8xf32> -> vector<16x8xf32>
    %136 = vector.extract_strided_slice %67 {offsets = [16, 0], sizes = [8, 32], strides = [1, 1]} : vector<32x32xbf16> to vector<8x32xbf16>
    %137 = arith.truncf %135 : vector<16x8xf32> to vector<16x8xbf16>
    %cst_38 = arith.constant dense<0.000000e+00> : vector<16x32xf32>
    %138 = tpu.matmul %137, %136, %cst_38 {dimension_numbers = #tpu.dot_dimension_numbers<[1], [0], [0], [1], [0, 0, 1, 1], [], []>} : vector<16x8xbf16>, vector<8x32xbf16>, vector<16x32xf32> -> vector<16x32xf32>
    %139 = arith.addf %119, %138 : vector<16x32xf32>
    %140 = vector.extract_strided_slice %72 {offsets = [0, 24], sizes = [16, 8], strides = [1, 1]} : vector<16x32xbf16> to vector<16x8xbf16>
    %141 = vector.extract_strided_slice %75 {offsets = [0, 24], sizes = [16, 8], strides = [1, 1]} : vector<16x32xbf16> to vector<16x8xbf16>
    %cst_39 = arith.constant dense<0.000000e+00> : vector<16x16xf32>
    %142 = tpu.matmul %140, %141, %cst_39 {dimension_numbers = #tpu.dot_dimension_numbers<[1], [1], [0], [0], [0, 0, 1, 0], [], []>} : vector<16x8xbf16>, vector<16x8xbf16>, vector<16x16xf32> -> vector<16x16xf32>
    %cst_40 = arith.constant dense<0xFF800000> : vector<16xf32>
    %143 = vector.multi_reduction <maximumf>, %142, %cst_40 [1] : vector<16x16xf32> to vector<16xf32>
    %144 = vector.shape_cast %143 : vector<16xf32> to vector<16x1xf32>
    %145 = vector.broadcast %144 : vector<16x1xf32> to vector<16x16xf32>
    %146 = arith.subf %142, %145 : vector<16x16xf32>
    %147 = math.exp %146 : vector<16x16xf32>
    %cst_41 = arith.constant dense<0.000000e+00> : vector<16xf32>
    %148 = vector.multi_reduction <add>, %147, %cst_41 [1] : vector<16x16xf32> to vector<16xf32>
    %149 = vector.shape_cast %148 : vector<16xf32> to vector<16x1xf32>
    %150 = tpu.reciprocal %149 {approx = true} : vector<16x1xf32> -> vector<16x1xf32>
    %151 = vector.broadcast %150 : vector<16x1xf32> to vector<16x16xf32>
    %152 = arith.mulf %147, %151 : vector<16x16xf32>
    %153 = vector.extract_strided_slice %78 {offsets = [0, 24], sizes = [16, 8], strides = [1, 1]} : vector<16x32xbf16> to vector<16x8xbf16>
    %154 = arith.truncf %152 : vector<16x16xf32> to vector<16x16xbf16>
    %cst_42 = arith.constant dense<0.000000e+00> : vector<16x8xf32>
    %155 = tpu.matmul %154, %153, %cst_42 {dimension_numbers = #tpu.dot_dimension_numbers<[1], [0], [0], [1], [0, 0, 1, 1], [], []>} : vector<16x16xbf16>, vector<16x8xbf16>, vector<16x8xf32> -> vector<16x8xf32>
    %156 = vector.extract_strided_slice %67 {offsets = [24, 0], sizes = [8, 32], strides = [1, 1]} : vector<32x32xbf16> to vector<8x32xbf16>
    %157 = arith.truncf %155 : vector<16x8xf32> to vector<16x8xbf16>
    %cst_43 = arith.constant dense<0.000000e+00> : vector<16x32xf32>
    %158 = tpu.matmul %157, %156, %cst_43 {dimension_numbers = #tpu.dot_dimension_numbers<[1], [0], [0], [1], [0, 0, 1, 1], [], []>} : vector<16x8xbf16>, vector<8x32xbf16>, vector<16x32xf32> -> vector<16x32xf32>
    %159 = arith.addf %139, %158 : vector<16x32xf32>
    %160 = vector.shape_cast %6 : vector<32xf32> to vector<1x32xf32>
    %161 = vector.broadcast %160 : vector<1x32xf32> to vector<16x32xf32>
    %162 = arith.addf %159, %161 : vector<16x32xf32>
    %163 = vector.shape_cast %8 : vector<32xf32> to vector<1x32xf32>
    %164 = vector.broadcast %163 : vector<1x32xf32> to vector<16x32xf32>
    %165 = arith.mulf %164, %162 : vector<16x32xf32>
    %166 = arith.addf %15, %165 : vector<16x32xf32>
    %c0_44 = arith.constant 0 : index
    %c0_45 = arith.constant 0 : index
    %c0_46 = arith.constant 0 : index
    %167 = vector.load %arg6[%c0_44, %c0_45, %c0_46] : memref<1x16x32xf32, #tpu.memory_space<vmem>>, vector<1x16x32xf32>
    %168 = vector.shape_cast %167 : vector<1x16x32xf32> to vector<16x32xf32>
    %169 = vector.shape_cast %166 : vector<16x32xf32> to vector<1x16x32xf32>
    tpu.vector_store %arg6[%c0_44, %c0_45, %c0_46], %169 {strides = array<i32>} : memref<1x16x32xf32, #tpu.memory_space<vmem>>, vector<1x16x32xf32>,
    return
  }
  func.func @transform_0(%arg0: i32, %arg1: i32) -> (i32, i32, i32) {
    %c0_i32 = arith.constant 0 : i32
    %c0_i32_0 = arith.constant 0 : i32
    %c0_i32_1 = arith.constant 0 : i32
    return %arg0, %c0_i32, %c0_i32_0 : i32, i32, i32
  }
  func.func @transform_1(%arg0: i32, %arg1: i32) -> (i32, i32) {
    %c0_i32 = arith.constant 0 : i32
    %c0_i32_0 = arith.constant 0 : i32
    %c0_i32_1 = arith.constant 0 : i32
    return %c0_i32, %c0_i32_0 : i32, i32
  }
  func.func @transform_2(%arg0: i32, %arg1: i32) -> (i32, i32) {
    %c0_i32 = arith.constant 0 : i32
    %c0_i32_0 = arith.constant 0 : i32
    %c0_i32_1 = arith.constant 0 : i32
    return %c0_i32, %c0_i32_0 : i32, i32
  }
  func.func @transform_3(%arg0: i32, %arg1: i32) -> (i32, i32) {
    %c0_i32 = arith.constant 0 : i32
    %c0_i32_0 = arith.constant 0 : i32
    %c0_i32_1 = arith.constant 0 : i32
    return %c0_i32, %c0_i32_0 : i32, i32
  }
  func.func @transform_4(%arg0: i32, %arg1: i32) -> (i32, i32, i32) {
    %c0_i32 = arith.constant 0 : i32
    %c0_i32_0 = arith.constant 0 : i32
    return %arg0, %arg1, %c0_i32 : i32, i32, i32
  }
}

</mosaic_0001>

<llo_original>
// kernel: tpu_custom_call.1
$region0: #{tpu_custom_call.1}
  #allocation0 [shape = 'u32[]', space=smem, size = 0x4, offset = 0x4, fixed_abs, tag = 'smem constant byte address 0x4 - core index']
  #allocation1 [shape = 'u32[144,128]{1,0:T(1,128)}', space=vmem, size = 0x12000, scoped, tag = 'internal scratch']
  %s0 = inlined_call_operand.hbm [shape: f32[2,16,32], index: 0, kind: input, shape index: {}]
  %s1 = inlined_call_operand.hbm [shape: f32[4,32], index: 1, kind: input, shape index: {}]
  %s2 = inlined_call_operand.hbm [shape: bf16[32,96], index: 2, kind: input, shape index: {}]
  %s3 = inlined_call_operand.hbm [shape: bf16[32,32], index: 3, kind: input, shape index: {}]
  %s4 = inlined_call_operand.hbm [shape: f32[2,16,32], index: 4, kind: output, shape index: {}]
  %s5 = sld [smem:[#allocation0]]
  $region65: #{tpu_custom_call.1} parent=0
    _
  %s7 = ssub.s32 1, %s5
  %s8 = scalar_select 0, %s7, %s5
  $region1: #{tpu_custom_call.1} parent=0
    #allocation2 [shape = 'u8[16384]{0}', space=vmem, size = 0x4000, scoped, tag = 'input window, operand 0']
    #allocation3 [shape = 's32[2]{0}', space=sflag, size = 0x8, scoped, tag = 'scoped memory for tpu_custom_call.1']
    #allocation4 [shape = 's32[2]{0}', space=sflag, size = 0x8, scoped, tag = 'scoped memory for tpu_custom_call.1']
    #allocation5 [shape = 'u8[2048]{0}', space=vmem, size = 0x800, scoped, tag = 'input window, operand 1, single buffered']
    #allocation6 [shape = 's32[1]{0}', space=sflag, size = 0x4, scoped, tag = 'scoped memory for tpu_custom_call.1']
    #allocation7 [shape = 'u8[8192]{0}', space=vmem, size = 0x2000, scoped, tag = 'input window, operand 2, single buffered']
    #allocation8 [shape = 'u8[8192]{0}', space=vmem, size = 0x2000, scoped, tag = 'input window, operand 3, single buffered']
    #allocation9 [shape = 's32[1]{0}', space=sflag, size = 0x4, scoped, tag = 'scoped memory for tpu_custom_call.1']
    #allocation10 [shape = 'u8[16384]{0}', space=vmem, size = 0x4000, scoped, tag = 'output window, operand 0']
    %9 = vsyncpa [#allocation3], 0
    %s10 = scalar_lea.sflag [#allocation3], 1
    %11 = vsyncpa %s10, 0
    %12 = vsyncpa [#allocation6], 0
    %13 = vsyncpa [#allocation9], 0
    %14 = vsyncpa [#allocation4], 0
    %s15 = scalar_lea.sflag [#allocation4], 1
    %16 = vsyncpa %s15, 0
    loop: start=0, step=1, limit=4
    $region2: #{tpu_custom_call.1} parent=1 // loop_pre_header
      _
    $region3: #{tpu_custom_call.1} parent=1 // loop_header
      %s18 = sphi 0, %s22
      %p19 = scmp.ge.s32.totalorder %s18, 4
      %s25 = sphi 0, %s37
      %s26 = sphi 0, %s33
      %s27 = sphi 0, %s25
      %s28 = sphi 0, %s26
      %s29 = sphi 0, %s27
      %s30 = sphi 0, %s28
      %s40 = sphi 0, %s42
      %s43 = sphi 0, %s40
      %s44 = sphi 0, %s43
      %s60 = sphi 0, %s44
      %s64 = sphi 0, %s64
      %s66 = sphi 0, %s64
      %s67 = sphi 0, %s66
      %s81 = sphi 0, %s67
      %s85 = sphi 0, %s85
      %s87 = sphi 0, %s85
      %s88 = sphi 0, %s87
      %s102 = sphi 0, %s88
      %s106 = sphi 0, %s106
      %s108 = sphi 0, %s106
      %s109 = sphi 0, %s108
      %s123 = sphi 0, %s109
      %s131 = sphi 0, %s133
      %s134 = sphi 0, %s131
      %s135 = sphi 0, %s134
      %s151 = sphi 0, %s135
    $region4: #{tpu_custom_call.1} parent=1 // loop_header_branch
      %21 = sbr.rel (%p19) target = $region8
    $region5: #{tpu_custom_call.1} parent=1 // loop_body
      %s23 = ssub.s32 %s18, 1
      %s24 = ssub.s32 %s18, 2
      %s31 = sadd.s32 1, %s26
      %p32 = scmp.ge.s32.totalorder %s31, 1
      %s33 = scalar_select %p32, 0, %s31
      %s34 = sadd.s32 1, %s25
      %s35 = scalar_select %p32, %s34, %s25
      %p36 = scmp.ge.s32.totalorder %s35, 2
      %s37 = scalar_select %p36, 0, %s35
      %s38 = ssub.s32 %s25, %s37
      %p39 = scmp.eq.s32.totalorder %s38, 0
      %s41 = sadd.s32 %s40, 1
      %s42 = scalar_select %p39, %s40, %s41
      %p45 = pneg %p39
      %p46 = scmp.eq.s32.totalorder %s18, 1
      %p47 = por %p45, %p46
      %p48 = scmp.ne.s32.totalorder %s40, %s43
      %p49 = scmp.eq.s32.totalorder %s18, 0
      %p50 = por %p48, %p49
      %p51 = scmp.ne.s32.totalorder %s40, %s43
      %p52 = scmp.eq.s32.totalorder %s23, 1
      %p53 = por %p51, %p52
      %p54 = scmp.ne.s32.totalorder %s43, %s44
      %p55 = scmp.eq.s32.totalorder %s23, 0
      %p56 = por %p54, %p55
      %p57 = scmp.ne.s32.totalorder %s43, %s44
      %p58 = scmp.eq.s32.totalorder %s24, 1
      %p59 = por %p57, %p58
      %p61 = scmp.ne.s32.totalorder %s44, %s60
      %p62 = scmp.eq.s32.totalorder %s24, 0
      %p63 = por %p61, %p62
      %s65 = sadd.s32 %s64, 1
      %p68 = scmp.eq.s32.totalorder %s18, 1
      %p69 = scmp.ne.s32.totalorder %s64, %s66
      %p70 = scmp.eq.s32.totalorder %s18, 0
      %p71 = por %p69, %p70
      %p72 = scmp.ne.s32.totalorder %s64, %s66
      %p73 = scmp.eq.s32.totalorder %s23, 1
      %p74 = por %p72, %p73
      %p75 = scmp.ne.s32.totalorder %s66, %s67
      %p76 = scmp.eq.s32.totalorder %s23, 0
      %p77 = por %p75, %p76
      %p78 = scmp.ne.s32.totalorder %s66, %s67
      %p79 = scmp.eq.s32.totalorder %s24, 1
      %p80 = por %p78, %p79
      %p82 = scmp.ne.s32.totalorder %s67, %s81
      %p83 = scmp.eq.s32.totalorder %s24, 0
      %p84 = por %p82, %p83
      %s86 = sadd.s32 %s85, 1
      %p89 = scmp.eq.s32.totalorder %s18, 1
      %p90 = scmp.ne.s32.totalorder %s85, %s87
      %p91 = scmp.eq.s32.totalorder %s18, 0
      %p92 = por %p90, %p91
      %p93 = scmp.ne.s32.totalorder %s85, %s87
      %p94 = scmp.eq.s32.totalorder %s23, 1
      %p95 = por %p93, %p94
      %p96 = scmp.ne.s32.totalorder %s87, %s88
      %p97 = scmp.eq.s32.totalorder %s23, 0
      %p98 = por %p96, %p97
      %p99 = scmp.ne.s32.totalorder %s87, %s88
      %p100 = scmp.eq.s32.totalorder %s24, 1
      %p101 = por %p99, %p100
      %p103 = scmp.ne.s32.totalorder %s88, %s102
      %p104 = scmp.eq.s32.totalorder %s24, 0
      %p105 = por %p103, %p104
      %s107 = sadd.s32 %s106, 1
      %p110 = scmp.eq.s32.totalorder %s18, 1
      %p111 = scmp.ne.s32.totalorder %s106, %s108
      %p112 = scmp.eq.s32.totalorder %s18, 0
      %p113 = por %p111, %p112
      %p114 = scmp.ne.s32.totalorder %s106, %s108
      %p115 = scmp.eq.s32.totalorder %s23, 1
      %p116 = por %p114, %p115
      %p117 = scmp.ne.s32.totalorder %s108, %s109
      %p118 = scmp.eq.s32.totalorder %s23, 0
      %p119 = por %p117, %p118
      %p120 = scmp.ne.s32.totalorder %s108, %s109
      %p121 = scmp.eq.s32.totalorder %s24, 1
      %p122 = por %p120, %p121
      %p124 = scmp.ne.s32.totalorder %s109, %s123
      %p125 = scmp.eq.s32.totalorder %s24, 0
      %p126 = por %p124, %p125
      %s127 = ssub.s32 %s25, %s37
      %s128 = ssub.s32 %s26, %s33
      %s129 = sor.u32 %s127, %s128
      %p130 = scmp.eq.s32.totalorder %s129, 0
      %s132 = sadd.s32 %s131, 1
      %s133 = scalar_select %p130, %s131, %s132
      %p136 = pneg %p130
      %p137 = scmp.eq.s32.totalorder %s18, 1
      %p138 = por %p136, %p137
      %p139 = scmp.ne.s32.totalorder %s131, %s134
      %p140 = scmp.eq.s32.totalorder %s18, 0
      %p141 = por %p139, %p140
      %p142 = scmp.ne.s32.totalorder %s131, %s134
      %p143 = scmp.eq.s32.totalorder %s23, 1
      %p144 = por %p142, %p143
      %p145 = scmp.ne.s32.totalorder %s134, %s135
      %p146 = scmp.eq.s32.totalorder %s23, 0
      %p147 = por %p145, %p146
      %p148 = scmp.ne.s32.totalorder %s134, %s135
      %p149 = scmp.eq.s32.totalorder %s24, 1
      %p150 = por %p148, %p149
      %p152 = scmp.ne.s32.totalorder %s135, %s151
      %p153 = scmp.eq.s32.totalorder %s24, 0
      %p154 = por %p152, %p153
      %p155 = scmp.le.s32.totalorder 1, %s18
      %p156 = scmp.lt.s32.totalorder %s18, 3
      %p157 = pnand %p155, %p156
      %p158 = pneg %p157
      // Predicated region
      $region9: #{tpu_custom_call.1} parent=5 // pred_check
        _
      $region10: #{tpu_custom_call.1} parent=5 // pred_check_branch
        %160 = sbr.rel (%p157) target = $region12
      $region11: #{tpu_custom_call.1} parent=5 // pred_region
        %s161 = ssub.s32 %s18, 1
        // Predicated region
        $region13: #{tpu_custom_call.1} parent=11 // pred_check
          %p162 = pneg %p77
        $region14: #{tpu_custom_call.1} parent=11 // pred_check_branch
          %164 = sbr.rel (%p162) target = $region16
        $region15: #{tpu_custom_call.1} parent=11 // pred_region
          %s166 = ssub.s32 64, 64
          %167 = vsyncadd [#allocation6], %s166
          %s169 = sshll.u32 [#allocation5], 4
          %s170 = int_to_ptr.vmem [resolvable:$true] %s169
          %172 = dma.hbm_to_vmem [thread:$0]  %s1, 64, %s170, [#allocation6]
        $region16: #{tpu_custom_call.1} parent=11 // pred_fallthru
          _
        // Predicated region
        $region17: #{tpu_custom_call.1} parent=11 // pred_check
          %p173 = pneg %p98
        $region18: #{tpu_custom_call.1} parent=11 // pred_check_branch
          %175 = sbr.rel (%p173) target = $region20
        $region19: #{tpu_custom_call.1} parent=11 // pred_region
          %s177 = ssub.s32 256, 256
          %178 = vsyncadd [#allocation6], %s177
          %s179 = sshll.u32 [#allocation7], 4
          %s180 = int_to_ptr.vmem [resolvable:$true] %s179
          %185 = dma.hbm_to_vmem [thread:$0]  %s2, 256, %s180, [#allocation6], 64, 64, 4
        $region20: #{tpu_custom_call.1} parent=11 // pred_fallthru
          _
        // Predicated region
        $region21: #{tpu_custom_call.1} parent=11 // pred_check
          %p186 = pneg %p119
        $region22: #{tpu_custom_call.1} parent=11 // pred_check_branch
          %188 = sbr.rel (%p186) target = $region24
        $region23: #{tpu_custom_call.1} parent=11 // pred_region
          %s190 = ssub.s32 256, 256
          %191 = vsyncadd [#allocation9], %s190
          %s192 = sshll.u32 [#allocation8], 4
          %s193 = int_to_ptr.vmem [resolvable:$true] %s192
          %198 = dma.hbm_to_vmem [thread:$0]  %s3, 256, %s193, [#allocation9], 64, 64, 4
        $region24: #{tpu_custom_call.1} parent=11 // pred_fallthru
          _
      $region12: #{tpu_custom_call.1} parent=5 // pred_fallthru
        _
      %p199 = scmp.lt.s32.totalorder %s18, 2
      // Predicated region
      $region25: #{tpu_custom_call.1} parent=5 // pred_check
        %p200 = pneg %p199
      $region26: #{tpu_custom_call.1} parent=5 // pred_check_branch
        %202 = sbr.rel (%p200) target = $region28
      $region27: #{tpu_custom_call.1} parent=5 // pred_region
        // Predicated region
        $region29: #{tpu_custom_call.1} parent=27 // pred_check
          %p203 = pneg %p50
        $region30: #{tpu_custom_call.1} parent=27 // pred_check_branch
          %205 = sbr.rel (%p203) target = $region32
        $region31: #{tpu_custom_call.1} parent=27 // pred_region
          %s206 = sand.u32 %s40, 1
          %s207 = scalar_lea.sflag [#allocation3], %s206
          %s208 = sand.u32 %s40, 1
          %s209 = smul.addr %s208, 16
          %s210 = scalar_lea.vmem [#allocation2], %s209
          %s212 = ssub.s32 256, 256
          %213 = vsyncadd %s207, %s212
          %s214 = smul.addr %s25, 2
          %s215 = smul.addr %s214, 128
          %s216 = scalar_lea.hbm %s0, %s215
          %s217 = sshll.u32 %s210, 4
          %s218 = int_to_ptr.vmem [resolvable:$true] %s217
          %223 = dma.hbm_to_vmem [thread:$0]  %s216, 256, %s218, %s207, 128, 128, 8
        $region32: #{tpu_custom_call.1} parent=27 // pred_fallthru
          _
      $region28: #{tpu_custom_call.1} parent=5 // pred_fallthru
        _
      %p224 = scmp.le.s32.totalorder 1, %s18
      %p225 = scmp.lt.s32.totalorder %s18, 3
      %p226 = pnand %p224, %p225
      %p227 = pneg %p226
      // Predicated region
      $region33: #{tpu_custom_call.1} parent=5 // pred_check
        _
      $region34: #{tpu_custom_call.1} parent=5 // pred_check_branch
        %229 = sbr.rel (%p226) target = $region36
      $region35: #{tpu_custom_call.1} parent=5 // pred_region
        %s230 = ssub.s32 %s18, 1
        %s231 = sand.u32 %s43, 1
        %s232 = scalar_lea.sflag [#allocation3], %s231
        %s233 = sand.u32 %s43, 1
        %s234 = smul.addr %s233, 16
        %s235 = scalar_lea.vmem [#allocation2], %s234
        // Predicated region
        $region37: #{tpu_custom_call.1} parent=35 // pred_check
          %p236 = pneg %p56
        $region38: #{tpu_custom_call.1} parent=35 // pred_check_branch
          %238 = sbr.rel (%p236) target = $region40
        $region39: #{tpu_custom_call.1} parent=35 // pred_region
          %239 = dma.done %s232, 256
        $region40: #{tpu_custom_call.1} parent=35 // pred_fallthru
          _
        // Predicated region
        $region41: #{tpu_custom_call.1} parent=35 // pred_check
          %p240 = pneg %p77
        $region42: #{tpu_custom_call.1} parent=35 // pred_check_branch
          %242 = sbr.rel (%p240) target = $region44
        $region43: #{tpu_custom_call.1} parent=35 // pred_region
          %243 = dma.done [#allocation6], 64
        $region44: #{tpu_custom_call.1} parent=35 // pred_fallthru
          _
        // Predicated region
        $region45: #{tpu_custom_call.1} parent=35 // pred_check
          %p244 = pneg %p98
        $region46: #{tpu_custom_call.1} parent=35 // pred_check_branch
          %246 = sbr.rel (%p244) target = $region48
        $region47: #{tpu_custom_call.1} parent=35 // pred_region
          %247 = dma.done [#allocation6], 256
        $region48: #{tpu_custom_call.1} parent=35 // pred_fallthru
          _
        // Predicated region
        $region49: #{tpu_custom_call.1} parent=35 // pred_check
          %p248 = pneg %p119
        $region50: #{tpu_custom_call.1} parent=35 // pred_check_branch
          %250 = sbr.rel (%p248) target = $region52
        $region51: #{tpu_custom_call.1} parent=35 // pred_region
          %251 = dma.done [#allocation9], 256
        $region52: #{tpu_custom_call.1} parent=35 // pred_fallthru
          _
        %s252 = sand.u32 %s43, 1
        %s253 = scalar_lea.sflag [#allocation3], %s252
        %s254 = sand.u32 %s43, 1
        %s255 = smul.addr %s254, 16
        %s256 = scalar_lea.vmem [#allocation2], %s255
        %p257 = pneg %p56
        %p258 = pneg %p53
        %p259 = pneg %p77
        %p260 = pneg %p74
        %p261 = pneg %p98
        %p262 = pneg %p95
        %p263 = pneg %p119
        %p264 = pneg %p116
        %p265 = pneg %p147
        %p266 = pneg %p144
        %s267 = sand.u32 %s134, 1
        %s268 = scalar_lea.sflag [#allocation4], %s267
        %s269 = sand.u32 %s134, 1
        %s270 = smul.addr %s269, 16
        %s271 = scalar_lea.vmem [#allocation10], %s270
        %s272 = smul.u32 2, %s28
        %v274 = vld [vmem:[#allocation5] sm:$0xf]
        %v275 = vld [vmem:[%s235] sm:$0xff]
        %v276 = vld [vmem:[%s235 + $0x8] sm:$0xff]
        %s277 = smul.u32 %s28, 16
        %s278 = scalar_lea.vmem %s235, %s277 [#allocation2]
        %v279 = vld [vmem:[%s278] sm:$0xff]
        %v280 = vld [vmem:[%s278 + $0x8] sm:$0xff]
        %vm281 = vcmask 261120
        %v282 = vsel %vm281, %v279, 0.0
        %283 = vadd.xlane.f32.xlu0 %v282
        %v284 = vpop.xlane.xlu0 %283
        %v285 = vsel %vm281, %v280, 0.0
        %286 = vadd.xlane.f32.xlu0 %v285
        %v287 = vpop.xlane.xlu0 %286
        %v288 = vrcp.pop 32.0
        %v289 = vmul.f32 %v284, %v288
        %v290 = vmul.f32 %v287, %v288
        %v291 = vsub.f32 %v279, %v289
        %v292 = vsub.f32 %v280, %v290
        %v293 = vmul.f32 %v291, %v291
        %v294 = vmul.f32 %v292, %v292
        %v295 = vsel %vm281, %v293, 0.0
        %296 = vadd.xlane.f32.xlu0 %v295
        %v297 = vpop.xlane.xlu0 %296
        %v298 = vsel %vm281, %v294, 0.0
        %299 = vadd.xlane.f32.xlu0 %v298
        %v300 = vpop.xlane.xlu0 %299
        %v301 = vmul.f32 %v297, %v288
        %v302 = vmul.f32 %v300, %v288
        %v303 = vadd.f32 %v301, 1e-05
        %v304 = vadd.f32 %v302, 1e-05
        %v305 = vrsqrt.pop %v303
        %v306 = vrsqrt.pop %v304
        %v307 = vmul.f32 %v291, %v305
        %v308 = vmul.f32 %v292, %v306
        %v309 = vlaneseq
        %v310 = vshrl.u32 %v309, 7
        %v311 = vsub.s32 0, %v310
        %v312 = vrot.slane %v274, %v311
        %v313 = vmul.f32 %v307, %v312
        %v314 = vmul.f32 %v308, %v312
        %v315 = vlaneseq
        %v316 = vshrl.u32 %v315, 7
        %v317 = vsub.s32 1, %v316
        %v318 = vrot.slane %v274, %v317
        %v319 = vadd.f32 %v313, %v318
        %v320 = vadd.f32 %v314, %v318
        %v321 = vpack.c.bf16 %v320, %v319
        %v322 = vsel %vm281, %v275, 0.0
        %323 = vadd.xlane.f32.xlu0 %v322
        %v324 = vpop.xlane.xlu0 %323
        %v325 = vsel %vm281, %v276, 0.0
        %326 = vadd.xlane.f32.xlu0 %v325
        %v327 = vpop.xlane.xlu0 %326
        %v328 = vmul.f32 %v324, %v288
        %v329 = vmul.f32 %v327, %v288
        %v330 = vsub.f32 %v275, %v328
        %v331 = vsub.f32 %v276, %v329
        %v332 = vmul.f32 %v330, %v330
        %v333 = vmul.f32 %v331, %v331
        %v334 = vsel %vm281, %v332, 0.0
        %335 = vadd.xlane.f32.xlu0 %v334
        %v336 = vpop.xlane.xlu0 %335
        %v337 = vsel %vm281, %v333, 0.0
        %338 = vadd.xlane.f32.xlu0 %v337
        %v339 = vpop.xlane.xlu0 %338
        %v340 = vmul.f32 %v336, %v288
        %v341 = vmul.f32 %v339, %v288
        %v342 = vadd.f32 %v340, 1e-05
        %v343 = vadd.f32 %v341, 1e-05
        %v344 = vrsqrt.pop %v342
        %v345 = vrsqrt.pop %v343
        %v346 = vmul.f32 %v330, %v344
        %v347 = vmul.f32 %v331, %v345
        %v348 = vmul.f32 %v346, %v312
        %v349 = vmul.f32 %v347, %v312
        %v350 = vadd.f32 %v348, %v318
        %v351 = vadd.f32 %v349, %v318
        %v352 = vpack.c.bf16 %v351, %v350
        %v353 = vld [vmem:[#allocation7] sm:$0xf]
        %v354 = vld [vmem:[#allocation7 + $0x4] sm:$0xf]
        %v355 = vld [vmem:[#allocation7 + $0x8] sm:$0xf]
        %v356 = vld [vmem:[#allocation7 + $0xc] sm:$0xf]
        %v357 = vld [vmem:[#allocation8] sm:$0xf]
        %v358 = vld [vmem:[#allocation8 + $0x4] sm:$0xf]
        %v359 = vld [vmem:[#allocation8 + $0x8] sm:$0xf]
        %v360 = vld [vmem:[#allocation8 + $0xc] sm:$0xf]
        %v365 = vunpack.c.l.b16 %v353
        %v366 = vunpack.c.l.b16 %v354
        %v367 = vunpack.c.l.b16 %v355
        %v368 = vunpack.c.l.b16 %v356
        %v369 = vpack.c.b16 %v366, %v365
        %v370 = vpack.c.b16 %v368, %v367
        %v374 = vsel %vm281, %v321, 0
        %376 = vmatprep.subr.bf16.mxu0 0
        %377 = vmatpush1.bf16.msra.mxu0 %v369
        %378 = vmatprep.subr.bf16.mxu0 0
        %379 = vmatpush1.bf16.msra.mxu0 %v370
        %380 = vmatprep.subr.bf16.mxu0 0
        %381 = vmatpush1.bf16.msra.mxu0 0
        %382 = vmatprep.subr.bf16.mxu0 0
        %383 = vmatpush1.bf16.msra.mxu0 0
        %384 = vmatprep.subr.bf16.mxu0 0
        %385 = vmatpush1.bf16.msra.mxu0 0
        %386 = vmatprep.subr.bf16.mxu0 0
        %387 = vmatpush1.bf16.msra.mxu0 0
        %388 = vmatprep.subr.bf16.mxu0 0
        %389 = vmatpush1.bf16.msra.mxu0 0
        %390 = vmatprep.subr.bf16.mxu0 0
        %391 = vmatpush1.bf16.msra.mxu0 0
        %392 = vmatprep.subr.bf16.mxu0 0
        %393 = vmatpush1.bf16.msra.mxu0 0
        %394 = vmatprep.subr.bf16.mxu0 0
        %395 = vmatpush1.bf16.msra.mxu0 0
        %396 = vmatprep.subr.bf16.mxu0 0
        %397 = vmatpush1.bf16.msra.mxu0 0
        %398 = vmatprep.subr.bf16.mxu0 0
        %399 = vmatpush1.bf16.msra.mxu0 0
        %400 = vmatprep.subr.bf16.mxu0 0
        %401 = vmatpush1.bf16.msra.mxu0 0
        %402 = vmatprep.subr.bf16.mxu0 0
        %403 = vmatpush1.bf16.msra.mxu0 0
        %404 = vmatprep.subr.bf16.mxu0 0
        %405 = vmatpush1.bf16.msra.mxu0 0
        %406 = vmatprep.subr.bf16.mxu0 0
        %407 = vmatpush1.bf16.msra.mxu0 0
        %408 = vmatprep.mubr.bf16.mxu0 0
        %409 = vmatmul.mubr.bf16.gmra.mrb[0].mxu0 %v374
        %v410 = vpop.f32.mrb[0].mxu0
        %v411 = vadd.f32 0.0, %v410
        %v412 = vpop.f32.mrb[0].mxu0
        %v413 = vpop.f32.mrb[0].mxu0
        %v414 = vadd.f32 0.0, %v413
        %v415 = vpop.f32.mrb[0].mxu0
        %416 = vdwg.mxu0
        %v417 = vmul.f32 %v411, 0.35355338
        %v418 = vmul.f32 %v414, 0.35355338
        %v419 = vpack.c.bf16 %v418, %v417
        %420 = vrot.lane.b32.xlu0 %v369, 96
        %v421 = vpop.permute.xlu0 %420
        %422 = vrot.lane.b32.xlu0 %v370, 96
        %v423 = vpop.permute.xlu0 %422
        %v427 = vsel %vm281, %v352, 0
        %429 = vmatprep.subr.bf16.mxu0 0
        %430 = vmatpush1.bf16.msra.mxu0 %v421
        %431 = vmatprep.subr.bf16.mxu0 0
        %432 = vmatpush1.bf16.msra.mxu0 %v423
        %433 = vmatprep.subr.bf16.mxu0 0
        %434 = vmatpush1.bf16.msra.mxu0 0
        %435 = vmatprep.subr.bf16.mxu0 0
        %436 = vmatpush1.bf16.msra.mxu0 0
        %437 = vmatprep.subr.bf16.mxu0 0
        %438 = vmatpush1.bf16.msra.mxu0 0
        %439 = vmatprep.subr.bf16.mxu0 0
        %440 = vmatpush1.bf16.msra.mxu0 0
        %441 = vmatprep.subr.bf16.mxu0 0
        %442 = vmatpush1.bf16.msra.mxu0 0
        %443 = vmatprep.subr.bf16.mxu0 0
        %444 = vmatpush1.bf16.msra.mxu0 0
        %445 = vmatprep.subr.bf16.mxu0 0
        %446 = vmatpush1.bf16.msra.mxu0 0
        %447 = vmatprep.subr.bf16.mxu0 0
        %448 = vmatpush1.bf16.msra.mxu0 0
        %449 = vmatprep.subr.bf16.mxu0 0
        %450 = vmatpush1.bf16.msra.mxu0 0
        %451 = vmatprep.subr.bf16.mxu0 0
        %452 = vmatpush1.bf16.msra.mxu0 0
        %453 = vmatprep.subr.bf16.mxu0 0
        %454 = vmatpush1.bf16.msra.mxu0 0
        %455 = vmatprep.subr.bf16.mxu0 0
        %456 = vmatpush1.bf16.msra.mxu0 0
        %457 = vmatprep.subr.bf16.mxu0 0
        %458 = vmatpush1.bf16.msra.mxu0 0
        %459 = vmatprep.subr.bf16.mxu0 0
        %460 = vmatpush1.bf16.msra.mxu0 0
        %461 = vmatprep.mubr.bf16.mxu0 0
        %462 = vmatmul.mubr.bf16.gmra.mrb[0].mxu0 %v427
        %v463 = vpop.f32.mrb[0].mxu0
        %v464 = vadd.f32 0.0, %v463
        %v465 = vpop.f32.mrb[0].mxu0
        %v466 = vpop.f32.mrb[0].mxu0
        %v467 = vadd.f32 0.0, %v466
        %v468 = vpop.f32.mrb[0].mxu0
        %469 = vdwg.mxu0
        %v470 = vpack.c.bf16 %v467, %v464
        %471 = vrot.lane.b32.xlu0 %v369, 64
        %v472 = vpop.permute.xlu0 %471
        %473 = vrot.lane.b32.xlu0 %v370, 64
        %v474 = vpop.permute.xlu0 %473
        %477 = vmatprep.subr.bf16.mxu0 0
        %478 = vmatpush1.bf16.msra.mxu0 %v472
        %479 = vmatprep.subr.bf16.mxu0 0
        %480 = vmatpush1.bf16.msra.mxu0 %v474
        %481 = vmatprep.subr.bf16.mxu0 0
        %482 = vmatpush1.bf16.msra.mxu0 0
        %483 = vmatprep.subr.bf16.mxu0 0
        %484 = vmatpush1.bf16.msra.mxu0 0
        %485 = vmatprep.subr.bf16.mxu0 0
        %486 = vmatpush1.bf16.msra.mxu0 0
        %487 = vmatprep.subr.bf16.mxu0 0
        %488 = vmatpush1.bf16.msra.mxu0 0
        %489 = vmatprep.subr.bf16.mxu0 0
        %490 = vmatpush1.bf16.msra.mxu0 0
        %491 = vmatprep.subr.bf16.mxu0 0
        %492 = vmatpush1.bf16.msra.mxu0 0
        %493 = vmatprep.subr.bf16.mxu0 0
        %494 = vmatpush1.bf16.msra.mxu0 0
        %495 = vmatprep.subr.bf16.mxu0 0
        %496 = vmatpush1.bf16.msra.mxu0 0
        %497 = vmatprep.subr.bf16.mxu0 0
        %498 = vmatpush1.bf16.msra.mxu0 0
        %499 = vmatprep.subr.bf16.mxu0 0
        %500 = vmatpush1.bf16.msra.mxu0 0
        %501 = vmatprep.subr.bf16.mxu0 0
        %502 = vmatpush1.bf16.msra.mxu0 0
        %503 = vmatprep.subr.bf16.mxu0 0
        %504 = vmatpush1.bf16.msra.mxu0 0
        %505 = vmatprep.subr.bf16.mxu0 0
        %506 = vmatpush1.bf16.msra.mxu0 0
        %507 = vmatprep.subr.bf16.mxu0 0
        %508 = vmatpush1.bf16.msra.mxu0 0
        %509 = vmatprep.mubr.bf16.mxu0 0
        %510 = vmatmul.mubr.bf16.gmra.mrb[0].mxu0 %v427
        %v511 = vpop.f32.mrb[0].mxu0
        %v512 = vadd.f32 0.0, %v511
        %v513 = vpop.f32.mrb[0].mxu0
        %v514 = vpop.f32.mrb[0].mxu0
        %v515 = vadd.f32 0.0, %v514
        %v516 = vpop.f32.mrb[0].mxu0
        %517 = vdwg.mxu0
        %v518 = vpack.c.bf16 %v515, %v512
        %vm519 = vcmask 64512
        %v521 = vsel %vm519, %v419, 0
        %v524 = vsel %vm519, %v470, 0
        %526 = vmatprep.subr.bf16.mxu0 0
        %527 = vmatpush1.bf16.xpose.msra.mxu0 %v524
        %528 = vmatprep.subr.bf16.mxu0 0
        %529 = vmatpush1.bf16.xpose.msra.mxu0 0
        %530 = vmatprep.subr.bf16.mxu0 0
        %531 = vmatpush1.bf16.xpose.msra.mxu0 0
        %532 = vmatprep.subr.bf16.mxu0 0
        %533 = vmatpush1.bf16.xpose.msra.mxu0 0
        %534 = vmatprep.subr.bf16.mxu0 0
        %535 = vmatpush1.bf16.xpose.msra.mxu0 0
        %536 = vmatprep.subr.bf16.mxu0 0
        %537 = vmatpush1.bf16.xpose.msra.mxu0 0
        %538 = vmatprep.subr.bf16.mxu0 0
        %539 = vmatpush1.bf16.xpose.msra.mxu0 0
        %540 = vmatprep.subr.bf16.mxu0 0
        %541 = vmatpush1.bf16.xpose.msra.mxu0 0
        %542 = vmatprep.subr.bf16.mxu0 0
        %543 = vmatpush1.bf16.xpose.msra.mxu0 0
        %544 = vmatprep.subr.bf16.mxu0 0
        %545 = vmatpush1.bf16.xpose.msra.mxu0 0
        %546 = vmatprep.subr.bf16.mxu0 0
        %547 = vmatpush1.bf16.xpose.msra.mxu0 0
        %548 = vmatprep.subr.bf16.mxu0 0
        %549 = vmatpush1.bf16.xpose.msra.mxu0 0
        %550 = vmatprep.subr.bf16.mxu0 0
        %551 = vmatpush1.bf16.xpose.msra.mxu0 0
        %552 = vmatprep.subr.bf16.mxu0 0
        %553 = vmatpush1.bf16.xpose.msra.mxu0 0
        %554 = vmatprep.subr.bf16.mxu0 0
        %555 = vmatpush1.bf16.xpose.msra.mxu0 0
        %556 = vmatprep.subr.bf16.mxu0 0
        %557 = vmatpush1.bf16.xpose.msra.mxu0 0
        %558 = vmatprep.mubr.bf16.mxu0 0
        %559 = vmatmul.mubr.bf16.gmra.mrb[0].mxu0 %v521
        %v560 = vpop.f32.mrb[0].mxu0
        %v561 = vadd.f32 0.0, %v560
        %v562 = vpop.f32.mrb[0].mxu0
        %v563 = vpop.f32.mrb[0].mxu0
        %v564 = vadd.f32 0.0, %v563
        %v565 = vpop.f32.mrb[0].mxu0
        %566 = vdwg.mxu0
        %vm567 = vcmask 130048
        %v568 = vsel %vm567, %v561, -inf
        %569 = vmax.xlane.f32.xlu0 %v568
        %v570 = vpop.xlane.xlu0 %569
        %v571 = vsel %vm567, %v564, -inf
        %572 = vmax.xlane.f32.xlu0 %v571
        %v573 = vpop.xlane.xlu0 %572
        %v574 = vsub.f32 %v561, %v570
        %v575 = vsub.f32 %v564, %v573
        %v576 = vmul.f32 %v574, 1.442695
        %v577 = vpow.pop %v576
        %v578 = vmul.f32 %v575, 1.442695
        %v579 = vpow.pop %v578
        %v580 = vsel %vm567, %v577, 0.0
        %581 = vadd.xlane.f32.xlu0 %v580
        %v582 = vpop.xlane.xlu0 %581
        %v583 = vsel %vm567, %v579, 0.0
        %584 = vadd.xlane.f32.xlu0 %v583
        %v585 = vpop.xlane.xlu0 %584
        %v586 = vrcp.pop %v582
        %v587 = vrcp.pop %v585
        %v588 = vmul.f32 %v577, %v586
        %v589 = vmul.f32 %v579, %v587
        %v590 = vpack.c.bf16 %v589, %v588
        %v592 = vsel %vm567, %v590, 0
        %594 = vmatprep.subr.bf16.mxu0 0
        %595 = vmatpush1.bf16.msra.mxu0 %v518
        %596 = vmatprep.subr.bf16.mxu0 0
        %597 = vmatpush1.bf16.msra.mxu0 0
        %598 = vmatprep.subr.bf16.mxu0 0
        %599 = vmatpush1.bf16.msra.mxu0 0
        %600 = vmatprep.subr.bf16.mxu0 0
        %601 = vmatpush1.bf16.msra.mxu0 0
        %602 = vmatprep.subr.bf16.mxu0 0
        %603 = vmatpush1.bf16.msra.mxu0 0
        %604 = vmatprep.subr.bf16.mxu0 0
        %605 = vmatpush1.bf16.msra.mxu0 0
        %606 = vmatprep.subr.bf16.mxu0 0
        %607 = vmatpush1.bf16.msra.mxu0 0
        %608 = vmatprep.subr.bf16.mxu0 0
        %609 = vmatpush1.bf16.msra.mxu0 0
        %610 = vmatprep.subr.bf16.mxu0 0
        %611 = vmatpush1.bf16.msra.mxu0 0
        %612 = vmatprep.subr.bf16.mxu0 0
        %613 = vmatpush1.bf16.msra.mxu0 0
        %614 = vmatprep.subr.bf16.mxu0 0
        %615 = vmatpush1.bf16.msra.mxu0 0
        %616 = vmatprep.subr.bf16.mxu0 0
        %617 = vmatpush1.bf16.msra.mxu0 0
        %618 = vmatprep.subr.bf16.mxu0 0
        %619 = vmatpush1.bf16.msra.mxu0 0
        %620 = vmatprep.subr.bf16.mxu0 0
        %621 = vmatpush1.bf16.msra.mxu0 0
        %622 = vmatprep.subr.bf16.mxu0 0
        %623 = vmatpush1.bf16.msra.mxu0 0
        %624 = vmatprep.subr.bf16.mxu0 0
        %625 = vmatpush1.bf16.msra.mxu0 0
        %626 = vmatprep.mubr.bf16.mxu0 0
        %627 = vmatmul.mubr.bf16.gmra.mrb[0].mxu0 %v592
        %v628 = vpop.f32.mrb[0].mxu0
        %v629 = vadd.f32 0.0, %v628
        %v630 = vpop.f32.mrb[0].mxu0
        %v631 = vpop.f32.mrb[0].mxu0
        %v632 = vadd.f32 0.0, %v631
        %v633 = vpop.f32.mrb[0].mxu0
        %634 = vdwg.mxu0
        %v635 = vpack.c.bf16 %v632, %v629
        %637 = vrot.lane.b32.xlu0 %v419, 120
        %v638 = vpop.permute.xlu0 %637
        %640 = vrot.lane.b32.xlu0 %v470, 120
        %v641 = vpop.permute.xlu0 %640
        %v643 = vsel %vm519, %v638, 0
        %v646 = vsel %vm519, %v641, 0
        %648 = vmatprep.subr.bf16.mxu0 0
        %649 = vmatpush1.bf16.xpose.msra.mxu0 %v646
        %650 = vmatprep.subr.bf16.mxu0 0
        %651 = vmatpush1.bf16.xpose.msra.mxu0 0
        %652 = vmatprep.subr.bf16.mxu0 0
        %653 = vmatpush1.bf16.xpose.msra.mxu0 0
        %654 = vmatprep.subr.bf16.mxu0 0
        %655 = vmatpush1.bf16.xpose.msra.mxu0 0
        %656 = vmatprep.subr.bf16.mxu0 0
        %657 = vmatpush1.bf16.xpose.msra.mxu0 0
        %658 = vmatprep.subr.bf16.mxu0 0
        %659 = vmatpush1.bf16.xpose.msra.mxu0 0
        %660 = vmatprep.subr.bf16.mxu0 0
        %661 = vmatpush1.bf16.xpose.msra.mxu0 0
        %662 = vmatprep.subr.bf16.mxu0 0
        %663 = vmatpush1.bf16.xpose.msra.mxu0 0
        %664 = vmatprep.subr.bf16.mxu0 0
        %665 = vmatpush1.bf16.xpose.msra.mxu0 0
        %666 = vmatprep.subr.bf16.mxu0 0
        %667 = vmatpush1.bf16.xpose.msra.mxu0 0
        %668 = vmatprep.subr.bf16.mxu0 0
        %669 = vmatpush1.bf16.xpose.msra.mxu0 0
        %670 = vmatprep.subr.bf16.mxu0 0
        %671 = vmatpush1.bf16.xpose.msra.mxu0 0
        %672 = vmatprep.subr.bf16.mxu0 0
        %673 = vmatpush1.bf16.xpose.msra.mxu0 0
        %674 = vmatprep.subr.bf16.mxu0 0
        %675 = vmatpush1.bf16.xpose.msra.mxu0 0
        %676 = vmatprep.subr.bf16.mxu0 0
        %677 = vmatpush1.bf16.xpose.msra.mxu0 0
        %678 = vmatprep.subr.bf16.mxu0 0
        %679 = vmatpush1.bf16.xpose.msra.mxu0 0
        %680 = vmatprep.mubr.bf16.mxu0 0
        %681 = vmatmul.mubr.bf16.gmra.mrb[0].mxu0 %v643
        %v682 = vpop.f32.mrb[0].mxu0
        %v683 = vadd.f32 0.0, %v682
        %v684 = vpop.f32.mrb[0].mxu0
        %v685 = vpop.f32.mrb[0].mxu0
        %v686 = vadd.f32 0.0, %v685
        %v687 = vpop.f32.mrb[0].mxu0
        %688 = vdwg.mxu0
        %v689 = vsel %vm567, %v683, -inf
        %690 = vmax.xlane.f32.xlu0 %v689
        %v691 = vpop.xlane.xlu0 %690
        %v692 = vsel %vm567, %v686, -inf
        %693 = vmax.xlane.f32.xlu0 %v692
        %v694 = vpop.xlane.xlu0 %693
        %v695 = vsub.f32 %v683, %v691
        %v696 = vsub.f32 %v686, %v694
        %v697 = vmul.f32 %v695, 1.442695
        %v698 = vpow.pop %v697
        %v699 = vmul.f32 %v696, 1.442695
        %v700 = vpow.pop %v699
        %v701 = vsel %vm567, %v698, 0.0
        %702 = vadd.xlane.f32.xlu0 %v701
        %v703 = vpop.xlane.xlu0 %702
        %v704 = vsel %vm567, %v700, 0.0
        %705 = vadd.xlane.f32.xlu0 %v704
        %v706 = vpop.xlane.xlu0 %705
        %v707 = vrcp.pop %v703
        %v708 = vrcp.pop %v706
        %v709 = vmul.f32 %v698, %v707
        %v710 = vmul.f32 %v700, %v708
        %v711 = vpack.c.bf16 %v710, %v709
        %713 = vrot.lane.b32.xlu0 %v518, 120
        %v714 = vpop.permute.xlu0 %713
        %v717 = vsel %vm567, %v711, 0
        %719 = vmatprep.subr.bf16.mxu0 0
        %720 = vmatpush1.bf16.msra.mxu0 %v714
        %721 = vmatprep.subr.bf16.mxu0 0
        %722 = vmatpush1.bf16.msra.mxu0 0
        %723 = vmatprep.subr.bf16.mxu0 0
        %724 = vmatpush1.bf16.msra.mxu0 0
        %725 = vmatprep.subr.bf16.mxu0 0
        %726 = vmatpush1.bf16.msra.mxu0 0
        %727 = vmatprep.subr.bf16.mxu0 0
        %728 = vmatpush1.bf16.msra.mxu0 0
        %729 = vmatprep.subr.bf16.mxu0 0
        %730 = vmatpush1.bf16.msra.mxu0 0
        %731 = vmatprep.subr.bf16.mxu0 0
        %732 = vmatpush1.bf16.msra.mxu0 0
        %733 = vmatprep.subr.bf16.mxu0 0
        %734 = vmatpush1.bf16.msra.mxu0 0
        %735 = vmatprep.subr.bf16.mxu0 0
        %736 = vmatpush1.bf16.msra.mxu0 0
        %737 = vmatprep.subr.bf16.mxu0 0
        %738 = vmatpush1.bf16.msra.mxu0 0
        %739 = vmatprep.subr.bf16.mxu0 0
        %740 = vmatpush1.bf16.msra.mxu0 0
        %741 = vmatprep.subr.bf16.mxu0 0
        %742 = vmatpush1.bf16.msra.mxu0 0
        %743 = vmatprep.subr.bf16.mxu0 0
        %744 = vmatpush1.bf16.msra.mxu0 0
        %745 = vmatprep.subr.bf16.mxu0 0
        %746 = vmatpush1.bf16.msra.mxu0 0
        %747 = vmatprep.subr.bf16.mxu0 0
        %748 = vmatpush1.bf16.msra.mxu0 0
        %749 = vmatprep.subr.bf16.mxu0 0
        %750 = vmatpush1.bf16.msra.mxu0 0
        %751 = vmatprep.mubr.bf16.mxu0 0
        %752 = vmatmul.mubr.bf16.gmra.mrb[0].mxu0 %v717
        %v753 = vpop.f32.mrb[0].mxu0
        %v754 = vadd.f32 0.0, %v753
        %v755 = vpop.f32.mrb[0].mxu0
        %v756 = vpop.f32.mrb[0].mxu0
        %v757 = vadd.f32 0.0, %v756
        %v758 = vpop.f32.mrb[0].mxu0
        %759 = vdwg.mxu0
        %v760 = vpack.c.bf16 %v757, %v754
        %v762 = vsel %vm519, %v760, 0
        %vm764 = vcmask 1043456
        %v766 = vsel %vm764, %v358, 0
        %768 = vmatprep.subr.bf16.mxu0 0
        %769 = vmatpush1.bf16.msra.mxu0 %v766
        %770 = vmatprep.subr.bf16.mxu0 0
        %771 = vmatpush1.bf16.msra.mxu0 0
        %772 = vmatprep.subr.bf16.mxu0 0
        %773 = vmatpush1.bf16.msra.mxu0 0
        %774 = vmatprep.subr.bf16.mxu0 0
        %775 = vmatpush1.bf16.msra.mxu0 0
        %776 = vmatprep.subr.bf16.mxu0 0
        %777 = vmatpush1.bf16.msra.mxu0 0
        %778 = vmatprep.subr.bf16.mxu0 0
        %779 = vmatpush1.bf16.msra.mxu0 0
        %780 = vmatprep.subr.bf16.mxu0 0
        %781 = vmatpush1.bf16.msra.mxu0 0
        %782 = vmatprep.subr.bf16.mxu0 0
        %783 = vmatpush1.bf16.msra.mxu0 0
        %784 = vmatprep.subr.bf16.mxu0 0
        %785 = vmatpush1.bf16.msra.mxu0 0
        %786 = vmatprep.subr.bf16.mxu0 0
        %787 = vmatpush1.bf16.msra.mxu0 0
        %788 = vmatprep.subr.bf16.mxu0 0
        %789 = vmatpush1.bf16.msra.mxu0 0
        %790 = vmatprep.subr.bf16.mxu0 0
        %791 = vmatpush1.bf16.msra.mxu0 0
        %792 = vmatprep.subr.bf16.mxu0 0
        %793 = vmatpush1.bf16.msra.mxu0 0
        %794 = vmatprep.subr.bf16.mxu0 0
        %795 = vmatpush1.bf16.msra.mxu0 0
        %796 = vmatprep.subr.bf16.mxu0 0
        %797 = vmatpush1.bf16.msra.mxu0 0
        %798 = vmatprep.subr.bf16.mxu0 0
        %799 = vmatpush1.bf16.msra.mxu0 0
        %800 = vmatprep.mubr.bf16.mxu0 0
        %801 = vmatmul.mubr.bf16.gmra.mrb[0].mxu0 %v762
        %v802 = vpop.f32.mrb[0].mxu0
        %v803 = vadd.f32 0.0, %v802
        %v804 = vpop.f32.mrb[0].mxu0
        %v805 = vpop.f32.mrb[0].mxu0
        %v806 = vadd.f32 0.0, %v805
        %v807 = vpop.f32.mrb[0].mxu0
        %808 = vdwg.mxu0
        %v810 = vsel %vm519, %v635, 0
        %v813 = vsel %vm764, %v357, 0
        %815 = vmatprep.subr.bf16.mxu0 0
        %816 = vmatpush1.bf16.msra.mxu0 %v813
        %817 = vmatprep.subr.bf16.mxu0 0
        %818 = vmatpush1.bf16.msra.mxu0 0
        %819 = vmatprep.subr.bf16.mxu0 0
        %820 = vmatpush1.bf16.msra.mxu0 0
        %821 = vmatprep.subr.bf16.mxu0 0
        %822 = vmatpush1.bf16.msra.mxu0 0
        %823 = vmatprep.subr.bf16.mxu0 0
        %824 = vmatpush1.bf16.msra.mxu0 0
        %825 = vmatprep.subr.bf16.mxu0 0
        %826 = vmatpush1.bf16.msra.mxu0 0
        %827 = vmatprep.subr.bf16.mxu0 0
        %828 = vmatpush1.bf16.msra.mxu0 0
        %829 = vmatprep.subr.bf16.mxu0 0
        %830 = vmatpush1.bf16.msra.mxu0 0
        %831 = vmatprep.subr.bf16.mxu0 0
        %832 = vmatpush1.bf16.msra.mxu0 0
        %833 = vmatprep.subr.bf16.mxu0 0
        %834 = vmatpush1.bf16.msra.mxu0 0
        %835 = vmatprep.subr.bf16.mxu0 0
        %836 = vmatpush1.bf16.msra.mxu0 0
        %837 = vmatprep.subr.bf16.mxu0 0
        %838 = vmatpush1.bf16.msra.mxu0 0
        %839 = vmatprep.subr.bf16.mxu0 0
        %840 = vmatpush1.bf16.msra.mxu0 0
        %841 = vmatprep.subr.bf16.mxu0 0
        %842 = vmatpush1.bf16.msra.mxu0 0
        %843 = vmatprep.subr.bf16.mxu0 0
        %844 = vmatpush1.bf16.msra.mxu0 0
        %845 = vmatprep.subr.bf16.mxu0 0
        %846 = vmatpush1.bf16.msra.mxu0 0
        %847 = vmatprep.mubr.bf16.mxu0 0
        %848 = vmatmul.mubr.bf16.gmra.mrb[0].mxu0 %v810
        %v849 = vpop.f32.mrb[0].mxu0
        %v850 = vadd.f32 %v803, %v849
        %v851 = vpop.f32.mrb[0].mxu0
        %v852 = vpop.f32.mrb[0].mxu0
        %v853 = vadd.f32 %v806, %v852
        %v854 = vpop.f32.mrb[0].mxu0
        %855 = vdwg.mxu0
        %856 = vrot.lane.b32.xlu0 %v419, 112
        %v857 = vpop.permute.xlu0 %856
        %858 = vrot.lane.b32.xlu0 %v470, 112
        %v859 = vpop.permute.xlu0 %858
        %v861 = vsel %vm519, %v857, 0
        %v864 = vsel %vm519, %v859, 0
        %866 = vmatprep.subr.bf16.mxu0 0
        %867 = vmatpush1.bf16.xpose.msra.mxu0 %v864
        %868 = vmatprep.subr.bf16.mxu0 0
        %869 = vmatpush1.bf16.xpose.msra.mxu0 0
        %870 = vmatprep.subr.bf16.mxu0 0
        %871 = vmatpush1.bf16.xpose.msra.mxu0 0
        %872 = vmatprep.subr.bf16.mxu0 0
        %873 = vmatpush1.bf16.xpose.msra.mxu0 0
        %874 = vmatprep.subr.bf16.mxu0 0
        %875 = vmatpush1.bf16.xpose.msra.mxu0 0
        %876 = vmatprep.subr.bf16.mxu0 0
        %877 = vmatpush1.bf16.xpose.msra.mxu0 0
        %878 = vmatprep.subr.bf16.mxu0 0
        %879 = vmatpush1.bf16.xpose.msra.mxu0 0
        %880 = vmatprep.subr.bf16.mxu0 0
        %881 = vmatpush1.bf16.xpose.msra.mxu0 0
        %882 = vmatprep.subr.bf16.mxu0 0
        %883 = vmatpush1.bf16.xpose.msra.mxu0 0
        %884 = vmatprep.subr.bf16.mxu0 0
        %885 = vmatpush1.bf16.xpose.msra.mxu0 0
        %886 = vmatprep.subr.bf16.mxu0 0
        %887 = vmatpush1.bf16.xpose.msra.mxu0 0
        %888 = vmatprep.subr.bf16.mxu0 0
        %889 = vmatpush1.bf16.xpose.msra.mxu0 0
        %890 = vmatprep.subr.bf16.mxu0 0
        %891 = vmatpush1.bf16.xpose.msra.mxu0 0
        %892 = vmatprep.subr.bf16.mxu0 0
        %893 = vmatpush1.bf16.xpose.msra.mxu0 0
        %894 = vmatprep.subr.bf16.mxu0 0
        %895 = vmatpush1.bf16.xpose.msra.mxu0 0
        %896 = vmatprep.subr.bf16.mxu0 0
        %897 = vmatpush1.bf16.xpose.msra.mxu0 0
        %898 = vmatprep.mubr.bf16.mxu0 0
        %899 = vmatmul.mubr.bf16.gmra.mrb[0].mxu0 %v861
        %v900 = vpop.f32.mrb[0].mxu0
        %v901 = vadd.f32 0.0, %v900
        %v902 = vpop.f32.mrb[0].mxu0
        %v903 = vpop.f32.mrb[0].mxu0
        %v904 = vadd.f32 0.0, %v903
        %v905 = vpop.f32.mrb[0].mxu0
        %906 = vdwg.mxu0
        %v907 = vsel %vm567, %v901, -inf
        %908 = vmax.xlane.f32.xlu0 %v907
        %v909 = vpop.xlane.xlu0 %908
        %v910 = vsel %vm567, %v904, -inf
        %911 = vmax.xlane.f32.xlu0 %v910
        %v912 = vpop.xlane.xlu0 %911
        %v913 = vsub.f32 %v901, %v909
        %v914 = vsub.f32 %v904, %v912
        %v915 = vmul.f32 %v913, 1.442695
        %v916 = vpow.pop %v915
        %v917 = vmul.f32 %v914, 1.442695
        %v918 = vpow.pop %v917
        %v919 = vsel %vm567, %v916, 0.0
        %920 = vadd.xlane.f32.xlu0 %v919
        %v921 = vpop.xlane.xlu0 %920
        %v922 = vsel %vm567, %v918, 0.0
        %923 = vadd.xlane.f32.xlu0 %v922
        %v924 = vpop.xlane.xlu0 %923
        %v925 = vrcp.pop %v921
        %v926 = vrcp.pop %v924
        %v927 = vmul.f32 %v916, %v925
        %v928 = vmul.f32 %v918, %v926
        %v929 = vpack.c.bf16 %v928, %v927
        %930 = vrot.lane.b32.xlu0 %v518, 112
        %v931 = vpop.permute.xlu0 %930
        %v934 = vsel %vm567, %v929, 0
        %936 = vmatprep.subr.bf16.mxu0 0
        %937 = vmatpush1.bf16.msra.mxu0 %v931
        %938 = vmatprep.subr.bf16.mxu0 0
        %939 = vmatpush1.bf16.msra.mxu0 0
        %940 = vmatprep.subr.bf16.mxu0 0
        %941 = vmatpush1.bf16.msra.mxu0 0
        %942 = vmatprep.subr.bf16.mxu0 0
        %943 = vmatpush1.bf16.msra.mxu0 0
        %944 = vmatprep.subr.bf16.mxu0 0
        %945 = vmatpush1.bf16.msra.mxu0 0
        %946 = vmatprep.subr.bf16.mxu0 0
        %947 = vmatpush1.bf16.msra.mxu0 0
        %948 = vmatprep.subr.bf16.mxu0 0
        %949 = vmatpush1.bf16.msra.mxu0 0
        %950 = vmatprep.subr.bf16.mxu0 0
        %951 = vmatpush1.bf16.msra.mxu0 0
        %952 = vmatprep.subr.bf16.mxu0 0
        %953 = vmatpush1.bf16.msra.mxu0 0
        %954 = vmatprep.subr.bf16.mxu0 0
        %955 = vmatpush1.bf16.msra.mxu0 0
        %956 = vmatprep.subr.bf16.mxu0 0
        %957 = vmatpush1.bf16.msra.mxu0 0
        %958 = vmatprep.subr.bf16.mxu0 0
        %959 = vmatpush1.bf16.msra.mxu0 0
        %960 = vmatprep.subr.bf16.mxu0 0
        %961 = vmatpush1.bf16.msra.mxu0 0
        %962 = vmatprep.subr.bf16.mxu0 0
        %963 = vmatpush1.bf16.msra.mxu0 0
        %964 = vmatprep.subr.bf16.mxu0 0
        %965 = vmatpush1.bf16.msra.mxu0 0
        %966 = vmatprep.subr.bf16.mxu0 0
        %967 = vmatpush1.bf16.msra.mxu0 0
        %968 = vmatprep.mubr.bf16.mxu0 0
        %969 = vmatmul.mubr.bf16.gmra.mrb[0].mxu0 %v934
        %v970 = vpop.f32.mrb[0].mxu0
        %v971 = vadd.f32 0.0, %v970
        %v972 = vpop.f32.mrb[0].mxu0
        %v973 = vpop.f32.mrb[0].mxu0
        %v974 = vadd.f32 0.0, %v973
        %v975 = vpop.f32.mrb[0].mxu0
        %976 = vdwg.mxu0
        %v977 = vpack.c.bf16 %v974, %v971
        %v979 = vsel %vm519, %v977, 0
        %v982 = vsel %vm764, %v359, 0
        %984 = vmatprep.subr.bf16.mxu0 0
        %985 = vmatpush1.bf16.msra.mxu0 %v982
        %986 = vmatprep.subr.bf16.mxu0 0
        %987 = vmatpush1.bf16.msra.mxu0 0
        %988 = vmatprep.subr.bf16.mxu0 0
        %989 = vmatpush1.bf16.msra.mxu0 0
        %990 = vmatprep.subr.bf16.mxu0 0
        %991 = vmatpush1.bf16.msra.mxu0 0
        %992 = vmatprep.subr.bf16.mxu0 0
        %993 = vmatpush1.bf16.msra.mxu0 0
        %994 = vmatprep.subr.bf16.mxu0 0
        %995 = vmatpush1.bf16.msra.mxu0 0
        %996 = vmatprep.subr.bf16.mxu0 0
        %997 = vmatpush1.bf16.msra.mxu0 0
        %998 = vmatprep.subr.bf16.mxu0 0
        %999 = vmatpush1.bf16.msra.mxu0 0
        %1000 = vmatprep.subr.bf16.mxu0 0
        %1001 = vmatpush1.bf16.msra.mxu0 0
        %1002 = vmatprep.subr.bf16.mxu0 0
        %1003 = vmatpush1.bf16.msra.mxu0 0
        %1004 = vmatprep.subr.bf16.mxu0 0
        %1005 = vmatpush1.bf16.msra.mxu0 0
        %1006 = vmatprep.subr.bf16.mxu0 0
        %1007 = vmatpush1.bf16.msra.mxu0 0
        %1008 = vmatprep.subr.bf16.mxu0 0
        %1009 = vmatpush1.bf16.msra.mxu0 0
        %1010 = vmatprep.subr.bf16.mxu0 0
        %1011 = vmatpush1.bf16.msra.mxu0 0
        %1012 = vmatprep.subr.bf16.mxu0 0
        %1013 = vmatpush1.bf16.msra.mxu0 0
        %1014 = vmatprep.subr.bf16.mxu0 0
        %1015 = vmatpush1.bf16.msra.mxu0 0
        %1016 = vmatprep.mubr.bf16.mxu0 0
        %1017 = vmatmul.mubr.bf16.gmra.mrb[0].mxu0 %v979
        %v1018 = vpop.f32.mrb[0].mxu0
        %v1019 = vadd.f32 0.0, %v1018
        %v1020 = vpop.f32.mrb[0].mxu0
        %v1021 = vpop.f32.mrb[0].mxu0
        %v1022 = vadd.f32 0.0, %v1021
        %v1023 = vpop.f32.mrb[0].mxu0
        %1024 = vdwg.mxu0
        %v1025 = vadd.f32 %v850, %v1019
        %v1026 = vadd.f32 %v853, %v1022
        %1027 = vrot.lane.b32.xlu0 %v419, 104
        %v1028 = vpop.permute.xlu0 %1027
        %1029 = vrot.lane.b32.xlu0 %v470, 104
        %v1030 = vpop.permute.xlu0 %1029
        %v1032 = vsel %vm519, %v1028, 0
        %v1035 = vsel %vm519, %v1030, 0
        %1037 = vmatprep.subr.bf16.mxu0 0
        %1038 = vmatpush1.bf16.xpose.msra.mxu0 %v1035
        %1039 = vmatprep.subr.bf16.mxu0 0
        %1040 = vmatpush1.bf16.xpose.msra.mxu0 0
        %1041 = vmatprep.subr.bf16.mxu0 0
        %1042 = vmatpush1.bf16.xpose.msra.mxu0 0
        %1043 = vmatprep.subr.bf16.mxu0 0
        %1044 = vmatpush1.bf16.xpose.msra.mxu0 0
        %1045 = vmatprep.subr.bf16.mxu0 0
        %1046 = vmatpush1.bf16.xpose.msra.mxu0 0
        %1047 = vmatprep.subr.bf16.mxu0 0
        %1048 = vmatpush1.bf16.xpose.msra.mxu0 0
        %1049 = vmatprep.subr.bf16.mxu0 0
        %1050 = vmatpush1.bf16.xpose.msra.mxu0 0
        %1051 = vmatprep.subr.bf16.mxu0 0
        %1052 = vmatpush1.bf16.xpose.msra.mxu0 0
        %1053 = vmatprep.subr.bf16.mxu0 0
        %1054 = vmatpush1.bf16.xpose.msra.mxu0 0
        %1055 = vmatprep.subr.bf16.mxu0 0
        %1056 = vmatpush1.bf16.xpose.msra.mxu0 0
        %1057 = vmatprep.subr.bf16.mxu0 0
        %1058 = vmatpush1.bf16.xpose.msra.mxu0 0
        %1059 = vmatprep.subr.bf16.mxu0 0
        %1060 = vmatpush1.bf16.xpose.msra.mxu0 0
        %1061 = vmatprep.subr.bf16.mxu0 0
        %1062 = vmatpush1.bf16.xpose.msra.mxu0 0
        %1063 = vmatprep.subr.bf16.mxu0 0
        %1064 = vmatpush1.bf16.xpose.msra.mxu0 0
        %1065 = vmatprep.subr.bf16.mxu0 0
        %1066 = vmatpush1.bf16.xpose.msra.mxu0 0
        %1067 = vmatprep.subr.bf16.mxu0 0
        %1068 = vmatpush1.bf16.xpose.msra.mxu0 0
        %1069 = vmatprep.mubr.bf16.mxu0 0
        %1070 = vmatmul.mubr.bf16.gmra.mrb[0].mxu0 %v1032
        %v1071 = vpop.f32.mrb[0].mxu0
        %v1072 = vadd.f32 0.0, %v1071
        %v1073 = vpop.f32.mrb[0].mxu0
        %v1074 = vpop.f32.mrb[0].mxu0
        %v1075 = vadd.f32 0.0, %v1074
        %v1076 = vpop.f32.mrb[0].mxu0
        %1077 = vdwg.mxu0
        %v1078 = vsel %vm567, %v1072, -inf
        %1079 = vmax.xlane.f32.xlu0 %v1078
        %v1080 = vpop.xlane.xlu0 %1079
        %v1081 = vsel %vm567, %v1075, -inf
        %1082 = vmax.xlane.f32.xlu0 %v1081
        %v1083 = vpop.xlane.xlu0 %1082
        %v1084 = vsub.f32 %v1072, %v1080
        %v1085 = vsub.f32 %v1075, %v1083
        %v1086 = vmul.f32 %v1084, 1.442695
        %v1087 = vpow.pop %v1086
        %v1088 = vmul.f32 %v1085, 1.442695
        %v1089 = vpow.pop %v1088
        %v1090 = vsel %vm567, %v1087, 0.0
        %1091 = vadd.xlane.f32.xlu0 %v1090
        %v1092 = vpop.xlane.xlu0 %1091
        %v1093 = vsel %vm567, %v1089, 0.0
        %1094 = vadd.xlane.f32.xlu0 %v1093
        %v1095 = vpop.xlane.xlu0 %1094
        %v1096 = vrcp.pop %v1092
        %v1097 = vrcp.pop %v1095
        %v1098 = vmul.f32 %v1087, %v1096
        %v1099 = vmul.f32 %v1089, %v1097
        %v1100 = vpack.c.bf16 %v1099, %v1098
        %1101 = vrot.lane.b32.xlu0 %v518, 104
        %v1102 = vpop.permute.xlu0 %1101
        %v1105 = vsel %vm567, %v1100, 0
        %1107 = vmatprep.subr.bf16.mxu0 0
        %1108 = vmatpush1.bf16.msra.mxu0 %v1102
        %1109 = vmatprep.subr.bf16.mxu0 0
        %1110 = vmatpush1.bf16.msra.mxu0 0
        %1111 = vmatprep.subr.bf16.mxu0 0
        %1112 = vmatpush1.bf16.msra.mxu0 0
        %1113 = vmatprep.subr.bf16.mxu0 0
        %1114 = vmatpush1.bf16.msra.mxu0 0
        %1115 = vmatprep.subr.bf16.mxu0 0
        %1116 = vmatpush1.bf16.msra.mxu0 0
        %1117 = vmatprep.subr.bf16.mxu0 0
        %1118 = vmatpush1.bf16.msra.mxu0 0
        %1119 = vmatprep.subr.bf16.mxu0 0
        %1120 = vmatpush1.bf16.msra.mxu0 0
        %1121 = vmatprep.subr.bf16.mxu0 0
        %1122 = vmatpush1.bf16.msra.mxu0 0
        %1123 = vmatprep.subr.bf16.mxu0 0
        %1124 = vmatpush1.bf16.msra.mxu0 0
        %1125 = vmatprep.subr.bf16.mxu0 0
        %1126 = vmatpush1.bf16.msra.mxu0 0
        %1127 = vmatprep.subr.bf16.mxu0 0
        %1128 = vmatpush1.bf16.msra.mxu0 0
        %1129 = vmatprep.subr.bf16.mxu0 0
        %1130 = vmatpush1.bf16.msra.mxu0 0
        %1131 = vmatprep.subr.bf16.mxu0 0
        %1132 = vmatpush1.bf16.msra.mxu0 0
        %1133 = vmatprep.subr.bf16.mxu0 0
        %1134 = vmatpush1.bf16.msra.mxu0 0
        %1135 = vmatprep.subr.bf16.mxu0 0
        %1136 = vmatpush1.bf16.msra.mxu0 0
        %1137 = vmatprep.subr.bf16.mxu0 0
        %1138 = vmatpush1.bf16.msra.mxu0 0
        %1139 = vmatprep.mubr.bf16.mxu0 0
        %1140 = vmatmul.mubr.bf16.gmra.mrb[0].mxu0 %v1105
        %v1141 = vpop.f32.mrb[0].mxu0
        %v1142 = vadd.f32 0.0, %v1141
        %v1143 = vpop.f32.mrb[0].mxu0
        %v1144 = vpop.f32.mrb[0].mxu0
        %v1145 = vadd.f32 0.0, %v1144
        %v1146 = vpop.f32.mrb[0].mxu0
        %1147 = vdwg.mxu0
        %v1148 = vpack.c.bf16 %v1145, %v1142
        %v1150 = vsel %vm519, %v1148, 0
        %v1153 = vsel %vm764, %v360, 0
        %1155 = vmatprep.subr.bf16.mxu0 0
        %1156 = vmatpush1.bf16.msra.mxu0 %v1153
        %1157 = vmatprep.subr.bf16.mxu0 0
        %1158 = vmatpush1.bf16.msra.mxu0 0
        %1159 = vmatprep.subr.bf16.mxu0 0
        %1160 = vmatpush1.bf16.msra.mxu0 0
        %1161 = vmatprep.subr.bf16.mxu0 0
        %1162 = vmatpush1.bf16.msra.mxu0 0
        %1163 = vmatprep.subr.bf16.mxu0 0
        %1164 = vmatpush1.bf16.msra.mxu0 0
        %1165 = vmatprep.subr.bf16.mxu0 0
        %1166 = vmatpush1.bf16.msra.mxu0 0
        %1167 = vmatprep.subr.bf16.mxu0 0
        %1168 = vmatpush1.bf16.msra.mxu0 0
        %1169 = vmatprep.subr.bf16.mxu0 0
        %1170 = vmatpush1.bf16.msra.mxu0 0
        %1171 = vmatprep.subr.bf16.mxu0 0
        %1172 = vmatpush1.bf16.msra.mxu0 0
        %1173 = vmatprep.subr.bf16.mxu0 0
        %1174 = vmatpush1.bf16.msra.mxu0 0
        %1175 = vmatprep.subr.bf16.mxu0 0
        %1176 = vmatpush1.bf16.msra.mxu0 0
        %1177 = vmatprep.subr.bf16.mxu0 0
        %1178 = vmatpush1.bf16.msra.mxu0 0
        %1179 = vmatprep.subr.bf16.mxu0 0
        %1180 = vmatpush1.bf16.msra.mxu0 0
        %1181 = vmatprep.subr.bf16.mxu0 0
        %1182 = vmatpush1.bf16.msra.mxu0 0
        %1183 = vmatprep.subr.bf16.mxu0 0
        %1184 = vmatpush1.bf16.msra.mxu0 0
        %1185 = vmatprep.subr.bf16.mxu0 0
        %1186 = vmatpush1.bf16.msra.mxu0 0
        %1187 = vmatprep.mubr.bf16.mxu0 0
        %1188 = vmatmul.mubr.bf16.gmra.mrb[0].mxu0 %v1150
        %v1189 = vpop.f32.mrb[0].mxu0
        %v1190 = vadd.f32 0.0, %v1189
        %v1191 = vpop.f32.mrb[0].mxu0
        %v1192 = vpop.f32.mrb[0].mxu0
        %v1193 = vadd.f32 0.0, %v1192
        %v1194 = vpop.f32.mrb[0].mxu0
        %1195 = vdwg.mxu0
        %v1196 = vadd.f32 %v1025, %v1190
        %v1197 = vadd.f32 %v1026, %v1193
        %v1198 = vlaneseq
        %v1199 = vshrl.u32 %v1198, 7
        %v1200 = vsub.s32 2, %v1199
        %v1201 = vrot.slane %v274, %v1200
        %v1202 = vadd.f32 %v1196, %v1201
        %v1203 = vadd.f32 %v1197, %v1201
        %v1204 = vlaneseq
        %v1205 = vshrl.u32 %v1204, 7
        %v1206 = vsub.s32 3, %v1205
        %v1207 = vrot.slane %v274, %v1206
        %v1208 = vmul.f32 %v1207, %v1202
        %v1209 = vmul.f32 %v1207, %v1203
        %v1210 = vadd.f32 %v279, %v1208
        %v1211 = vadd.f32 %v280, %v1209
        %1212 = vst.msk [vmem:[%s271] sm:$0xff] %vm281, %v1210
        %1213 = vst.msk [vmem:[%s271 + $0x8] sm:$0xff] %vm281, %v1211
        %s1214 = sand.u32 %s134, 1
        %s1215 = scalar_lea.sflag [#allocation4], %s1214
        %s1216 = sand.u32 %s134, 1
        %s1217 = smul.addr %s1216, 16
        %s1218 = scalar_lea.vmem [#allocation10], %s1217
        // Predicated region
        $region53: #{tpu_custom_call.1} parent=35 // pred_check
          %p1219 = pneg %p144
        $region54: #{tpu_custom_call.1} parent=35 // pred_check_branch
          %1221 = sbr.rel (%p1219) target = $region56
        $region55: #{tpu_custom_call.1} parent=35 // pred_region
          %s1222 = smul.u32 2, %s28
          %s1224 = ssub.s32 256, 256
          %1225 = vsyncadd %s1215, %s1224
          %s1226 = smul.addr %s27, 2
          %s1227 = sadd.s32 %s1222, %s1226
          %s1228 = smul.addr %s1227, 128
          %s1229 = scalar_lea.hbm %s4, %s1228
          %s1230 = sshll.u32 %s1218, 4
          %s1231 = int_to_ptr.vmem [resolvable:$true] %s1230
          %1236 = dma.vmem_to_hbm [thread:$0]  %s1231, 256, %s1229, %s1215, 128, 128, 8
        $region56: #{tpu_custom_call.1} parent=35 // pred_fallthru
          _
      $region36: #{tpu_custom_call.1} parent=5 // pred_fallthru
        _
      %p1237 = scmp.le.s32.totalorder 2, %s18
      // Predicated region
      $region57: #{tpu_custom_call.1} parent=5 // pred_check
        %p1238 = pneg %p1237
      $region58: #{tpu_custom_call.1} parent=5 // pred_check_branch
        %1240 = sbr.rel (%p1238) target = $region60
      $region59: #{tpu_custom_call.1} parent=5 // pred_region
        %s1241 = ssub.s32 %s18, 2
        // Predicated region
        $region61: #{tpu_custom_call.1} parent=59 // pred_check
          %p1242 = pneg %p150
        $region62: #{tpu_custom_call.1} parent=59 // pred_check_branch
          %1244 = sbr.rel (%p1242) target = $region64
        $region63: #{tpu_custom_call.1} parent=59 // pred_region
          %s1245 = sand.u32 %s135, 1
          %s1246 = scalar_lea.sflag [#allocation4], %s1245
          %s1247 = sand.u32 %s135, 1
          %s1248 = smul.addr %s1247, 16
          %s1249 = scalar_lea.vmem [#allocation10], %s1248
          %1250 = dma.done %s1246, 256
        $region64: #{tpu_custom_call.1} parent=59 // pred_fallthru
          _
      $region60: #{tpu_custom_call.1} parent=5 // pred_fallthru
        _
    $region6: #{tpu_custom_call.1} parent=1 // loop_footer
      %s22 = sadd.s32 1, %s18
    $region7: #{tpu_custom_call.1} parent=1 // loop_footer_branch
      %17 = sbr.rel target = $region3
    $region8: #{tpu_custom_call.1} parent=1 // loop_exit
      _
    %1251 = vsyncpa [#allocation3], 1
    %s1252 = scalar_lea.sflag [#allocation3], 1
    %1253 = vsyncpa %s1252, 1
    %1254 = vsyncpa [#allocation6], 1
    %1255 = vsyncpa [#allocation9], 1
    %1256 = vsyncpa [#allocation4], 1
    %s1257 = scalar_lea.sflag [#allocation4], 1
    %1258 = vsyncpa %s1257, 1

</llo_original>
